<compile_context>
chip_gen: v6e
topology: v6e:2x2x1
jax: 0.10.0
libtpu: 0.0.40
codegen_flags: <defaults>
</compile_context>

<pallas_src>
import functools

import jax
import jax.numpy as jnp
from jax.experimental import pallas as pl
from jax.experimental.pallas import tpu as pltpu

_EPS = 1e-5
_LANE = 128


def _round_up(x, m):
    return (x + m - 1) // m * m


# ---------------------------------------------------------------------------
# Pass 1: fused MaxPool2d(2,2) + zero-pad(1) + 3x3 conv (single K=9*Cin
# matmul) + BN partial statistics.  Grid over batch ("arbitrary" because the
# stats output block is revisited / accumulated across the axis).
# ---------------------------------------------------------------------------
def _pool_conv_stats_kernel(x_ref, w_ref, y_ref, st_ref, pad_ref, *, cin):
    # x_ref:  (1, H, W/2, 2*Cin)  NHWC with the W-pool pairs merged into lanes
    # w_ref:  (9*Cin, Cp)         flattened conv1 weights (K order: dh,dw,cin)
    # y_ref:  (H2*W2, Cp)         pre-BN conv1 output for this batch element
    # st_ref: (2, Cp)             running [sum ; sum-of-squares] over the batch
    # pad_ref:(H2+2, W2+2, Cin)   VMEM scratch: zero-padded pooled image
    _, h, w2, _ = x_ref.shape
    h2 = h // 2

    x = x_ref[0]                                       # (H, W2, 2*Cin)
    # 2x2 max-pool: W-direction pairs sit in the lane dim (sliced), H-direction
    # pairs in the leading dim (row pair max fused with the padded-scratch
    # write, so the pad never round-trips HBM).
    pw = jnp.maximum(x[:, :, :cin], x[:, :, cin:])     # (H, W2, Cin)
    pad_ref[...] = jnp.zeros_like(pad_ref)
    for i in range(h2):
        pad_ref[1 + i, 1:1 + w2, :] = jnp.maximum(pw[2 * i], pw[2 * i + 1])

    # in-VMEM im2col: one (H2*W2, 9*Cin) patch matrix -> ONE MXU matmul.
    patches = jnp.concatenate(
        [jnp.concatenate(
            [pad_ref[i + dh, dw:dw + w2, :] for dh in range(3) for dw in range(3)],
            axis=-1)
         for i in range(h2)],
        axis=0)                                        # (H2*W2, 9*Cin)
    acc = jnp.dot(patches, w_ref[...], preferred_element_type=jnp.float32)
    y_ref[...] = acc                                   # lane-dense (Cp=128) store

    @pl.when(pl.program_id(0) == 0)
    def _():
        st_ref[...] = jnp.zeros_like(st_ref)

    st_ref[...] += jnp.concatenate(
        [jnp.sum(acc, axis=0, keepdims=True),
         jnp.sum(acc * acc, axis=0, keepdims=True)], axis=0)


# ---------------------------------------------------------------------------
# Pass 2: BN1 (folded scale/shift from sum/sumsq) + ReLU + zero-pad + conv2
# (single K=9*Cp matmul) + BN2 partial statistics.
# ---------------------------------------------------------------------------
def _bn_relu_conv_stats_kernel(y_ref, st_in_ref, g_ref, b_ref, w_ref,
                               o_ref, st_out_ref, pad_ref, *, count, h2, w2):
    inv_n = 1.0 / count
    mean = st_in_ref[0:1, :] * inv_n
    var = st_in_ref[1:2, :] * inv_n - mean * mean      # single-pass variance
    scale = g_ref[...] * jax.lax.rsqrt(var + _EPS)     # folded BN affine
    shift = b_ref[...] - mean * scale
    z = jnp.maximum(y_ref[...] * scale + shift, 0.0)   # (H2*W2, Cp)

    pad_ref[...] = jnp.zeros_like(pad_ref)
    for i in range(h2):
        pad_ref[1 + i, 1:1 + w2, :] = z[i * w2:(i + 1) * w2, :]

    patches = jnp.concatenate(
        [jnp.concatenate(
            [pad_ref[i + dh, dw:dw + w2, :] for dh in range(3) for dw in range(3)],
            axis=-1)
         for i in range(h2)],
        axis=0)                                        # (H2*W2, 9*Cp)
    acc = jnp.dot(patches, w_ref[...], preferred_element_type=jnp.float32)
    o_ref[...] = acc

    @pl.when(pl.program_id(0) == 0)
    def _():
        st_out_ref[...] = jnp.zeros_like(st_out_ref)

    st_out_ref[...] += jnp.concatenate(
        [jnp.sum(acc, axis=0, keepdims=True),
         jnp.sum(acc * acc, axis=0, keepdims=True)], axis=0)


# ---------------------------------------------------------------------------
# Pass 3: BN2 (folded scale/shift) + ReLU.
# ---------------------------------------------------------------------------
def _bn_relu_kernel(y_ref, st_ref, g_ref, b_ref, o_ref, *, count):
    inv_n = 1.0 / count
    mean = st_ref[0:1, :] * inv_n
    var = st_ref[1:2, :] * inv_n - mean * mean
    scale = g_ref[...] * jax.lax.rsqrt(var + _EPS)
    shift = b_ref[...] - mean * scale
    o_ref[...] = jnp.maximum(y_ref[...] * scale + shift, 0.0)


# ---------------------------------------------------------------------------
# `Down.forward(x)` wrapper (NCHW in / NCHW out, like PyTorch).
# ---------------------------------------------------------------------------
def down_forward(x_nchw, p):
    n, cin, h, w = x_nchw.shape
    assert h % 2 == 0 and w % 2 == 0
    h2, w2 = h // 2, w // 2
    m2 = h2 * w2
    cout = p["w1"].shape[0]
    cp = _round_up(cout, _LANE)            # lane-dense channel slab
    count = float(n * m2)                  # BN reduction size (N*H2*W2)

    # NCHW -> NHWC, then merge (W, C) -> (W/2, 2C): contiguous (free) reshape
    # that puts the 2x2 pool's W-pairs on the lane axis for the kernel.
    x = jnp.transpose(x_nchw, (0, 2, 3, 1)).reshape(n, h, w2, 2 * cin)

    # conv1 weights (Cout, Cin, 3, 3) -> (9*Cin, Cp); conv bias is dropped
    # because BatchNorm's mean subtraction cancels it exactly.
    w1f = jnp.transpose(p["w1"], (2, 3, 1, 0)).reshape(9 * cin, cout)
    w1f = jnp.pad(w1f, ((0, 0), (0, cp - cout)))
    # conv2 weights lifted into the padded channel space: (9*Cp, Cp).
    w2k = jnp.transpose(p["w2"], (2, 3, 1, 0)).reshape(9, cout, cout)
    w2f = jnp.zeros((9, cp, cp), jnp.float32).at[:, :cout, :cout].set(w2k)
    w2f = w2f.reshape(9 * cp, cp)

    def cpad(v):  # (Cout,) -> (1, Cp); gamma pads with 0 so padded lanes stay 0
        return jnp.pad(v.reshape(1, cout), ((0, 0), (0, cp - cout)))

    g1, be1, g2, be2 = cpad(p["g1"]), cpad(p["be1"]), cpad(p["g2"]), cpad(p["be2"])

    def full_spec(arr):
        nd = arr.ndim
        return pl.BlockSpec(arr.shape, lambda i, _nd=nd: (0,) * _nd)

    row_block = pl.BlockSpec((m2, cp), lambda i: (i, 0))
    stat_block = pl.BlockSpec((2, cp), lambda i: (0, 0))

    # ---- pass 1: maxpool + pad + conv1 + BN1 stats -------------------------
    y1, st1 = pl.pallas_call(
        functools.partial(_pool_conv_stats_kernel, cin=cin),
        grid_spec=pltpu.PrefetchScalarGridSpec(
            num_scalar_prefetch=0,
            grid=(n,),
            in_specs=[
                pl.BlockSpec((1, h, w2, 2 * cin), lambda i: (i, 0, 0, 0)),
                full_spec(w1f),
            ],
            out_specs=[row_block, stat_block],
            scratch_shapes=[pltpu.VMEM((h2 + 2, w2 + 2, cin), jnp.float32)],
        ),
        out_shape=[
            jax.ShapeDtypeStruct((n * m2, cp), jnp.float32),
            jax.ShapeDtypeStruct((2, cp), jnp.float32),
        ],
        compiler_params=pltpu.CompilerParams(
            dimension_semantics=("arbitrary",)),
    )(x, w1f)

    # ---- pass 2: BN1 + ReLU + pad + conv2 + BN2 stats ----------------------
    y2, st2 = pl.pallas_call(
        functools.partial(_bn_relu_conv_stats_kernel, count=count, h2=h2, w2=w2),
        grid_spec=pltpu.PrefetchScalarGridSpec(
            num_scalar_prefetch=0,
            grid=(n,),
            in_specs=[
                row_block,
                full_spec(st1), full_spec(g1), full_spec(be1), full_spec(w2f),
            ],
            out_specs=[row_block, stat_block],
            scratch_shapes=[pltpu.VMEM((h2 + 2, w2 + 2, cp), jnp.float32)],
        ),
        out_shape=[
            jax.ShapeDtypeStruct((n * m2, cp), jnp.float32),
            jax.ShapeDtypeStruct((2, cp), jnp.float32),
        ],
        compiler_params=pltpu.CompilerParams(
            dimension_semantics=("arbitrary",)),
    )(y1, st1, g1, be1, w2f)

    # ---- pass 3: BN2 + ReLU ------------------------------------------------
    out = pl.pallas_call(
        functools.partial(_bn_relu_kernel, count=count),
        grid_spec=pltpu.PrefetchScalarGridSpec(
            num_scalar_prefetch=0,
            grid=(n,),
            in_specs=[row_block, full_spec(st2), full_spec(g2), full_spec(be2)],
            out_specs=row_block,
        ),
        out_shape=jax.ShapeDtypeStruct((n * m2, cp), jnp.float32),
        compiler_params=pltpu.CompilerParams(
            dimension_semantics=("parallel",)),
    )(y2, st2, g2, be2)

    out = out.reshape(n, h2, w2, cp)[:, :, :, :cout]
    return jnp.transpose(out, (0, 3, 1, 2))            # -> NCHW


# ---------------------------------------------------------------------------
# Pure-JAX reference (independent path, WITH the conv biases) for validation.
# ---------------------------------------------------------------------------
def _ref_bn_relu(y, gamma, beta):
    mean = jnp.mean(y, axis=(0, 1, 2), keepdims=True)
    var = jnp.mean((y - mean) ** 2, axis=(0, 1, 2), keepdims=True)
    return jnp.maximum((y - mean) * jax.lax.rsqrt(var + _EPS) * gamma + beta, 0.0)


def down_reference(x_nchw, p):
    x = jnp.transpose(x_nchw, (0, 2, 3, 1))
    n, h, w, c = x.shape
    pooled = jnp.max(x.reshape(n, h // 2, 2, w // 2, 2, c), axis=(2, 4))

    def conv(z, w_oihw, b):
        w_hwio = jnp.transpose(w_oihw, (2, 3, 1, 0))
        return jax.lax.conv_general_dilated(
            z, w_hwio, (1, 1), "SAME",
            dimension_numbers=("NHWC", "HWIO", "NHWC"),
            precision=jax.lax.Precision.HIGHEST) + b

    y = _ref_bn_relu(conv(pooled, p["w1"], p["b1"]), p["g1"], p["be1"])
    y = _ref_bn_relu(conv(y, p["w2"], p["b2"]), p["g2"], p["be2"])
    return jnp.transpose(y, (0, 3, 1, 2))


if __name__ == "__main__":
    in_ch, out_ch = 4, 8
    N, H, W = 2, 16, 16

    key = jax.random.PRNGKey(0)
    ks = jax.random.split(key, 9)
    params = dict(
        # DoubleConv(in_ch, out_ch): conv biases exist in the module but are
        # mathematically cancelled by BN; the reference uses them, the kernel
        # drops them.
        w1=0.1 * jax.random.normal(ks[0], (out_ch, in_ch, 3, 3), jnp.float32),
        b1=0.1 * jax.random.normal(ks[1], (out_ch,), jnp.float32),
        g1=1.0 + 0.1 * jax.random.normal(ks[2], (out_ch,), jnp.float32),
        be1=0.1 * jax.random.normal(ks[3], (out_ch,), jnp.float32),
        w2=0.1 * jax.random.normal(ks[4], (out_ch, out_ch, 3, 3), jnp.float32),
        b2=0.1 * jax.random.normal(ks[5], (out_ch,), jnp.float32),
        g2=1.0 + 0.1 * jax.random.normal(ks[6], (out_ch,), jnp.float32),
        be2=0.1 * jax.random.normal(ks[7], (out_ch,), jnp.float32),
    )
    x = jax.random.normal(ks[8], (N, in_ch, H, W), jnp.float32)

    out = jax.block_until_ready(down_forward(x, params))
    ref = jax.block_until_ready(down_reference(x, params))

    assert out.shape == (N, out_ch, H // 2, W // 2), out.shape
    max_err = float(jnp.max(jnp.abs(out - ref)))
    assert jnp.allclose(out, ref, atol=1e-3, rtol=1e-3), max_err
    print("KERNEL_OK")
</pallas_src>

<mosaic_0001>
module attributes {stable_mosaic.version = 11 : i64} {
  func.func @_pool_conv_stats_kernel(%arg0: i32, %arg1: memref<1x16x8x8xf32, #tpu.memory_space<vmem>>, %arg2: memref<36x128xf32, #tpu.memory_space<vmem>>, %arg3: memref<64x128xf32, #tpu.memory_space<vmem>>, %arg4: memref<2x128xf32, #tpu.memory_space<vmem>>, %arg5: memref<10x10x4xf32, #tpu.memory_space<vmem>>) attributes {dimension_semantics = [#tpu.dimension_semantics<arbitrary>], iteration_bounds = array<i64: 2>, scalar_prefetch = 0 : i64, scratch_operands = 1 : i64, tpu.core_type = #tpu.core_type<tc>, window_params = [{transform_indices = @transform_0, window_bounds = array<i64: 1, 16, 8, 8>}, {pipeline_mode = #tpu.pipeline_mode<synchronous>, transform_indices = @transform_1, window_bounds = array<i64: 36, 128>}, {transform_indices = @transform_2, window_bounds = array<i64: 64, 128>}, {pipeline_mode = #tpu.pipeline_mode<synchronous>, transform_indices = @transform_3, window_bounds = array<i64: 2, 128>}]} {
    %c0 = arith.constant 0 : index
    %c0_0 = arith.constant 0 : index
    %c0_1 = arith.constant 0 : index
    %c0_2 = arith.constant 0 : index
    %0 = vector.load %arg1[%c0, %c0_0, %c0_1, %c0_2] : memref<1x16x8x8xf32, #tpu.memory_space<vmem>>, vector<1x16x8x8xf32>
    %1 = vector.shape_cast %0 : vector<1x16x8x8xf32> to vector<16x8x8xf32>
    %2 = vector.extract_strided_slice %1 {offsets = [0, 0, 0], sizes = [16, 8, 4], strides = [1, 1, 1]} : vector<16x8x8xf32> to vector<16x8x4xf32>
    %3 = vector.extract_strided_slice %1 {offsets = [0, 0, 4], sizes = [16, 8, 4], strides = [1, 1, 1]} : vector<16x8x8xf32> to vector<16x8x4xf32>
    %4 = arith.maximumf %2, %3 : vector<16x8x4xf32>
    %cst = arith.constant 0.000000e+00 : f32
    %5 = vector.broadcast %cst : f32 to vector<10x10x4xf32>
    %c0_3 = arith.constant 0 : index
    %c0_4 = arith.constant 0 : index
    %c0_5 = arith.constant 0 : index
    %6 = vector.load %arg5[%c0_3, %c0_4, %c0_5] : memref<10x10x4xf32, #tpu.memory_space<vmem>>, vector<10x10x4xf32>
    tpu.vector_store %arg5[%c0_3, %c0_4, %c0_5], %5 {strides = array<i32>} : memref<10x10x4xf32, #tpu.memory_space<vmem>>, vector<10x10x4xf32>,
    %7 = vector.extract_strided_slice %4 {offsets = [0, 0, 0], sizes = [1, 8, 4], strides = [1, 1, 1]} : vector<16x8x4xf32> to vector<1x8x4xf32>
    %8 = vector.shape_cast %7 : vector<1x8x4xf32> to vector<8x4xf32>
    %9 = vector.extract_strided_slice %4 {offsets = [1, 0, 0], sizes = [1, 8, 4], strides = [1, 1, 1]} : vector<16x8x4xf32> to vector<1x8x4xf32>
    %10 = vector.shape_cast %9 : vector<1x8x4xf32> to vector<8x4xf32>
    %11 = arith.maximumf %8, %10 : vector<8x4xf32>
    %c1 = arith.constant 1 : index
    %c1_6 = arith.constant 1 : index
    %c0_7 = arith.constant 0 : index
    %12 = vector.load %arg5[%c1, %c1_6, %c0_7] : memref<10x10x4xf32, #tpu.memory_space<vmem>>, vector<1x8x4xf32>
    %13 = vector.shape_cast %12 : vector<1x8x4xf32> to vector<8x4xf32>
    %14 = vector.shape_cast %11 : vector<8x4xf32> to vector<1x8x4xf32>
    tpu.vector_store %arg5[%c1, %c1_6, %c0_7], %14 {strides = array<i32>} : memref<10x10x4xf32, #tpu.memory_space<vmem>>, vector<1x8x4xf32>,
    %15 = vector.extract_strided_slice %4 {offsets = [2, 0, 0], sizes = [1, 8, 4], strides = [1, 1, 1]} : vector<16x8x4xf32> to vector<1x8x4xf32>
    %16 = vector.shape_cast %15 : vector<1x8x4xf32> to vector<8x4xf32>
    %17 = vector.extract_strided_slice %4 {offsets = [3, 0, 0], sizes = [1, 8, 4], strides = [1, 1, 1]} : vector<16x8x4xf32> to vector<1x8x4xf32>
    %18 = vector.shape_cast %17 : vector<1x8x4xf32> to vector<8x4xf32>
    %19 = arith.maximumf %16, %18 : vector<8x4xf32>
    %c2 = arith.constant 2 : index
    %c1_8 = arith.constant 1 : index
    %c0_9 = arith.constant 0 : index
    %20 = vector.load %arg5[%c2, %c1_8, %c0_9] : memref<10x10x4xf32, #tpu.memory_space<vmem>>, vector<1x8x4xf32>
    %21 = vector.shape_cast %20 : vector<1x8x4xf32> to vector<8x4xf32>
    %22 = vector.shape_cast %19 : vector<8x4xf32> to vector<1x8x4xf32>
    tpu.vector_store %arg5[%c2, %c1_8, %c0_9], %22 {strides = array<i32>} : memref<10x10x4xf32, #tpu.memory_space<vmem>>, vector<1x8x4xf32>,
    %23 = vector.extract_strided_slice %4 {offsets = [4, 0, 0], sizes = [1, 8, 4], strides = [1, 1, 1]} : vector<16x8x4xf32> to vector<1x8x4xf32>
    %24 = vector.shape_cast %23 : vector<1x8x4xf32> to vector<8x4xf32>
    %25 = vector.extract_strided_slice %4 {offsets = [5, 0, 0], sizes = [1, 8, 4], strides = [1, 1, 1]} : vector<16x8x4xf32> to vector<1x8x4xf32>
    %26 = vector.shape_cast %25 : vector<1x8x4xf32> to vector<8x4xf32>
    %27 = arith.maximumf %24, %26 : vector<8x4xf32>
    %c3 = arith.constant 3 : index
    %c1_10 = arith.constant 1 : index
    %c0_11 = arith.constant 0 : index
    %28 = vector.load %arg5[%c3, %c1_10, %c0_11] : memref<10x10x4xf32, #tpu.memory_space<vmem>>, vector<1x8x4xf32>
    %29 = vector.shape_cast %28 : vector<1x8x4xf32> to vector<8x4xf32>
    %30 = vector.shape_cast %27 : vector<8x4xf32> to vector<1x8x4xf32>
    tpu.vector_store %arg5[%c3, %c1_10, %c0_11], %30 {strides = array<i32>} : memref<10x10x4xf32, #tpu.memory_space<vmem>>, vector<1x8x4xf32>,
    %31 = vector.extract_strided_slice %4 {offsets = [6, 0, 0], sizes = [1, 8, 4], strides = [1, 1, 1]} : vector<16x8x4xf32> to vector<1x8x4xf32>
    %32 = vector.shape_cast %31 : vector<1x8x4xf32> to vector<8x4xf32>
    %33 = vector.extract_strided_slice %4 {offsets = [7, 0, 0], sizes = [1, 8, 4], strides = [1, 1, 1]} : vector<16x8x4xf32> to vector<1x8x4xf32>
    %34 = vector.shape_cast %33 : vector<1x8x4xf32> to vector<8x4xf32>
    %35 = arith.maximumf %32, %34 : vector<8x4xf32>
    %c4 = arith.constant 4 : index
    %c1_12 = arith.constant 1 : index
    %c0_13 = arith.constant 0 : index
    %36 = vector.load %arg5[%c4, %c1_12, %c0_13] : memref<10x10x4xf32, #tpu.memory_space<vmem>>, vector<1x8x4xf32>
    %37 = vector.shape_cast %36 : vector<1x8x4xf32> to vector<8x4xf32>
    %38 = vector.shape_cast %35 : vector<8x4xf32> to vector<1x8x4xf32>
    tpu.vector_store %arg5[%c4, %c1_12, %c0_13], %38 {strides = array<i32>} : memref<10x10x4xf32, #tpu.memory_space<vmem>>, vector<1x8x4xf32>,
    %39 = vector.extract_strided_slice %4 {offsets = [8, 0, 0], sizes = [1, 8, 4], strides = [1, 1, 1]} : vector<16x8x4xf32> to vector<1x8x4xf32>
    %40 = vector.shape_cast %39 : vector<1x8x4xf32> to vector<8x4xf32>
    %41 = vector.extract_strided_slice %4 {offsets = [9, 0, 0], sizes = [1, 8, 4], strides = [1, 1, 1]} : vector<16x8x4xf32> to vector<1x8x4xf32>
    %42 = vector.shape_cast %41 : vector<1x8x4xf32> to vector<8x4xf32>
    %43 = arith.maximumf %40, %42 : vector<8x4xf32>
    %c5 = arith.constant 5 : index
    %c1_14 = arith.constant 1 : index
    %c0_15 = arith.constant 0 : index
    %44 = vector.load %arg5[%c5, %c1_14, %c0_15] : memref<10x10x4xf32, #tpu.memory_space<vmem>>, vector<1x8x4xf32>
    %45 = vector.shape_cast %44 : vector<1x8x4xf32> to vector<8x4xf32>
    %46 = vector.shape_cast %43 : vector<8x4xf32> to vector<1x8x4xf32>
    tpu.vector_store %arg5[%c5, %c1_14, %c0_15], %46 {strides = array<i32>} : memref<10x10x4xf32, #tpu.memory_space<vmem>>, vector<1x8x4xf32>,
    %47 = vector.extract_strided_slice %4 {offsets = [10, 0, 0], sizes = [1, 8, 4], strides = [1, 1, 1]} : vector<16x8x4xf32> to vector<1x8x4xf32>
    %48 = vector.shape_cast %47 : vector<1x8x4xf32> to vector<8x4xf32>
    %49 = vector.extract_strided_slice %4 {offsets = [11, 0, 0], sizes = [1, 8, 4], strides = [1, 1, 1]} : vector<16x8x4xf32> to vector<1x8x4xf32>
    %50 = vector.shape_cast %49 : vector<1x8x4xf32> to vector<8x4xf32>
    %51 = arith.maximumf %48, %50 : vector<8x4xf32>
    %c6 = arith.constant 6 : index
    %c1_16 = arith.constant 1 : index
    %c0_17 = arith.constant 0 : index
    %52 = vector.load %arg5[%c6, %c1_16, %c0_17] : memref<10x10x4xf32, #tpu.memory_space<vmem>>, vector<1x8x4xf32>
    %53 = vector.shape_cast %52 : vector<1x8x4xf32> to vector<8x4xf32>
    %54 = vector.shape_cast %51 : vector<8x4xf32> to vector<1x8x4xf32>
    tpu.vector_store %arg5[%c6, %c1_16, %c0_17], %54 {strides = array<i32>} : memref<10x10x4xf32, #tpu.memory_space<vmem>>, vector<1x8x4xf32>,
    %55 = vector.extract_strided_slice %4 {offsets = [12, 0, 0], sizes = [1, 8, 4], strides = [1, 1, 1]} : vector<16x8x4xf32> to vector<1x8x4xf32>
    %56 = vector.shape_cast %55 : vector<1x8x4xf32> to vector<8x4xf32>
    %57 = vector.extract_strided_slice %4 {offsets = [13, 0, 0], sizes = [1, 8, 4], strides = [1, 1, 1]} : vector<16x8x4xf32> to vector<1x8x4xf32>
    %58 = vector.shape_cast %57 : vector<1x8x4xf32> to vector<8x4xf32>
    %59 = arith.maximumf %56, %58 : vector<8x4xf32>
    %c7 = arith.constant 7 : index
    %c1_18 = arith.constant 1 : index
    %c0_19 = arith.constant 0 : index
    %60 = vector.load %arg5[%c7, %c1_18, %c0_19] : memref<10x10x4xf32, #tpu.memory_space<vmem>>, vector<1x8x4xf32>
    %61 = vector.shape_cast %60 : vector<1x8x4xf32> to vector<8x4xf32>
    %62 = vector.shape_cast %59 : vector<8x4xf32> to vector<1x8x4xf32>
    tpu.vector_store %arg5[%c7, %c1_18, %c0_19], %62 {strides = array<i32>} : memref<10x10x4xf32, #tpu.memory_space<vmem>>, vector<1x8x4xf32>,
    %63 = vector.extract_strided_slice %4 {offsets = [14, 0, 0], sizes = [1, 8, 4], strides = [1, 1, 1]} : vector<16x8x4xf32> to vector<1x8x4xf32>
    %64 = vector.shape_cast %63 : vector<1x8x4xf32> to vector<8x4xf32>
    %65 = vector.extract_strided_slice %4 {offsets = [15, 0, 0], sizes = [1, 8, 4], strides = [1, 1, 1]} : vector<16x8x4xf32> to vector<1x8x4xf32>
    %66 = vector.shape_cast %65 : vector<1x8x4xf32> to vector<8x4xf32>
    %67 = arith.maximumf %64, %66 : vector<8x4xf32>
    %c8 = arith.constant 8 : index
    %c1_20 = arith.constant 1 : index
    %c0_21 = arith.constant 0 : index
    %68 = vector.load %arg5[%c8, %c1_20, %c0_21] : memref<10x10x4xf32, #tpu.memory_space<vmem>>, vector<1x8x4xf32>
    %69 = vector.shape_cast %68 : vector<1x8x4xf32> to vector<8x4xf32>
    %70 = vector.shape_cast %67 : vector<8x4xf32> to vector<1x8x4xf32>
    tpu.vector_store %arg5[%c8, %c1_20, %c0_21], %70 {strides = array<i32>} : memref<10x10x4xf32, #tpu.memory_space<vmem>>, vector<1x8x4xf32>,
    %c0_22 = arith.constant 0 : index
    %c0_23 = arith.constant 0 : index
    %c0_24 = arith.constant 0 : index
    %71 = vector.load %arg5[%c0_22, %c0_23, %c0_24] : memref<10x10x4xf32, #tpu.memory_space<vmem>>, vector<1x8x4xf32>
    %72 = vector.shape_cast %71 : vector<1x8x4xf32> to vector<8x4xf32>
    %c0_25 = arith.constant 0 : index
    %c1_26 = arith.constant 1 : index
    %c0_27 = arith.constant 0 : index
    %73 = vector.load %arg5[%c0_25, %c1_26, %c0_27] : memref<10x10x4xf32, #tpu.memory_space<vmem>>, vector<1x8x4xf32>
    %74 = vector.shape_cast %73 : vector<1x8x4xf32> to vector<8x4xf32>
    %c0_28 = arith.constant 0 : index
    %c2_29 = arith.constant 2 : index
    %c0_30 = arith.constant 0 : index
    %75 = vector.load %arg5[%c0_28, %c2_29, %c0_30] : memref<10x10x4xf32, #tpu.memory_space<vmem>>, vector<1x8x4xf32>
    %76 = vector.shape_cast %75 : vector<1x8x4xf32> to vector<8x4xf32>
    %c1_31 = arith.constant 1 : index
    %c0_32 = arith.constant 0 : index
    %c0_33 = arith.constant 0 : index
    %77 = vector.load %arg5[%c1_31, %c0_32, %c0_33] : memref<10x10x4xf32, #tpu.memory_space<vmem>>, vector<1x8x4xf32>
    %78 = vector.shape_cast %77 : vector<1x8x4xf32> to vector<8x4xf32>
    %c1_34 = arith.constant 1 : index
    %c1_35 = arith.constant 1 : index
    %c0_36 = arith.constant 0 : index
    %79 = vector.load %arg5[%c1_34, %c1_35, %c0_36] : memref<10x10x4xf32, #tpu.memory_space<vmem>>, vector<1x8x4xf32>
    %80 = vector.shape_cast %79 : vector<1x8x4xf32> to vector<8x4xf32>
    %c1_37 = arith.constant 1 : index
    %c2_38 = arith.constant 2 : index
    %c0_39 = arith.constant 0 : index
    %81 = vector.load %arg5[%c1_37, %c2_38, %c0_39] : memref<10x10x4xf32, #tpu.memory_space<vmem>>, vector<1x8x4xf32>
    %82 = vector.shape_cast %81 : vector<1x8x4xf32> to vector<8x4xf32>
    %c2_40 = arith.constant 2 : index
    %c0_41 = arith.constant 0 : index
    %c0_42 = arith.constant 0 : index
    %83 = vector.load %arg5[%c2_40, %c0_41, %c0_42] : memref<10x10x4xf32, #tpu.memory_space<vmem>>, vector<1x8x4xf32>
    %84 = vector.shape_cast %83 : vector<1x8x4xf32> to vector<8x4xf32>
    %c2_43 = arith.constant 2 : index
    %c1_44 = arith.constant 1 : index
    %c0_45 = arith.constant 0 : index
    %85 = vector.load %arg5[%c2_43, %c1_44, %c0_45] : memref<10x10x4xf32, #tpu.memory_space<vmem>>, vector<1x8x4xf32>
    %86 = vector.shape_cast %85 : vector<1x8x4xf32> to vector<8x4xf32>
    %c2_46 = arith.constant 2 : index
    %c2_47 = arith.constant 2 : index
    %c0_48 = arith.constant 0 : index
    %87 = vector.load %arg5[%c2_46, %c2_47, %c0_48] : memref<10x10x4xf32, #tpu.memory_space<vmem>>, vector<1x8x4xf32>
    %88 = vector.shape_cast %87 : vector<1x8x4xf32> to vector<8x4xf32>
    %89 = tpu.concatenate %72, %74, %76, %78, %80, %82, %84, %86, %88 in 1 : vector<8x4xf32>, vector<8x4xf32>, vector<8x4xf32>, vector<8x4xf32>, vector<8x4xf32>, vector<8x4xf32>, vector<8x4xf32>, vector<8x4xf32>, vector<8x4xf32> -> vector<8x36xf32>
    %c1_49 = arith.constant 1 : index
    %c0_50 = arith.constant 0 : index
    %c0_51 = arith.constant 0 : index
    %90 = vector.load %arg5[%c1_49, %c0_50, %c0_51] : memref<10x10x4xf32, #tpu.memory_space<vmem>>, vector<1x8x4xf32>
    %91 = vector.shape_cast %90 : vector<1x8x4xf32> to vector<8x4xf32>
    %c1_52 = arith.constant 1 : index
    %c1_53 = arith.constant 1 : index
    %c0_54 = arith.constant 0 : index
    %92 = vector.load %arg5[%c1_52, %c1_53, %c0_54] : memref<10x10x4xf32, #tpu.memory_space<vmem>>, vector<1x8x4xf32>
    %93 = vector.shape_cast %92 : vector<1x8x4xf32> to vector<8x4xf32>
    %c1_55 = arith.constant 1 : index
    %c2_56 = arith.constant 2 : index
    %c0_57 = arith.constant 0 : index
    %94 = vector.load %arg5[%c1_55, %c2_56, %c0_57] : memref<10x10x4xf32, #tpu.memory_space<vmem>>, vector<1x8x4xf32>
    %95 = vector.shape_cast %94 : vector<1x8x4xf32> to vector<8x4xf32>
    %c2_58 = arith.constant 2 : index
    %c0_59 = arith.constant 0 : index
    %c0_60 = arith.constant 0 : index
    %96 = vector.load %arg5[%c2_58, %c0_59, %c0_60] : memref<10x10x4xf32, #tpu.memory_space<vmem>>, vector<1x8x4xf32>
    %97 = vector.shape_cast %96 : vector<1x8x4xf32> to vector<8x4xf32>
    %c2_61 = arith.constant 2 : index
    %c1_62 = arith.constant 1 : index
    %c0_63 = arith.constant 0 : index
    %98 = vector.load %arg5[%c2_61, %c1_62, %c0_63] : memref<10x10x4xf32, #tpu.memory_space<vmem>>, vector<1x8x4xf32>
    %99 = vector.shape_cast %98 : vector<1x8x4xf32> to vector<8x4xf32>
    %c2_64 = arith.constant 2 : index
    %c2_65 = arith.constant 2 : index
    %c0_66 = arith.constant 0 : index
    %100 = vector.load %arg5[%c2_64, %c2_65, %c0_66] : memref<10x10x4xf32, #tpu.memory_space<vmem>>, vector<1x8x4xf32>
    %101 = vector.shape_cast %100 : vector<1x8x4xf32> to vector<8x4xf32>
    %c3_67 = arith.constant 3 : index
    %c0_68 = arith.constant 0 : index
    %c0_69 = arith.constant 0 : index
    %102 = vector.load %arg5[%c3_67, %c0_68, %c0_69] : memref<10x10x4xf32, #tpu.memory_space<vmem>>, vector<1x8x4xf32>
    %103 = vector.shape_cast %102 : vector<1x8x4xf32> to vector<8x4xf32>
    %c3_70 = arith.constant 3 : index
    %c1_71 = arith.constant 1 : index
    %c0_72 = arith.constant 0 : index
    %104 = vector.load %arg5[%c3_70, %c1_71, %c0_72] : memref<10x10x4xf32, #tpu.memory_space<vmem>>, vector<1x8x4xf32>
    %105 = vector.shape_cast %104 : vector<1x8x4xf32> to vector<8x4xf32>
    %c3_73 = arith.constant 3 : index
    %c2_74 = arith.constant 2 : index
    %c0_75 = arith.constant 0 : index
    %106 = vector.load %arg5[%c3_73, %c2_74, %c0_75] : memref<10x10x4xf32, #tpu.memory_space<vmem>>, vector<1x8x4xf32>
    %107 = vector.shape_cast %106 : vector<1x8x4xf32> to vector<8x4xf32>
    %108 = tpu.concatenate %91, %93, %95, %97, %99, %101, %103, %105, %107 in 1 : vector<8x4xf32>, vector<8x4xf32>, vector<8x4xf32>, vector<8x4xf32>, vector<8x4xf32>, vector<8x4xf32>, vector<8x4xf32>, vector<8x4xf32>, vector<8x4xf32> -> vector<8x36xf32>
    %c2_76 = arith.constant 2 : index
    %c0_77 = arith.constant 0 : index
    %c0_78 = arith.constant 0 : index
    %109 = vector.load %arg5[%c2_76, %c0_77, %c0_78] : memref<10x10x4xf32, #tpu.memory_space<vmem>>, vector<1x8x4xf32>
    %110 = vector.shape_cast %109 : vector<1x8x4xf32> to vector<8x4xf32>
    %c2_79 = arith.constant 2 : index
    %c1_80 = arith.constant 1 : index
    %c0_81 = arith.constant 0 : index
    %111 = vector.load %arg5[%c2_79, %c1_80, %c0_81] : memref<10x10x4xf32, #tpu.memory_space<vmem>>, vector<1x8x4xf32>
    %112 = vector.shape_cast %111 : vector<1x8x4xf32> to vector<8x4xf32>
    %c2_82 = arith.constant 2 : index
    %c2_83 = arith.constant 2 : index
    %c0_84 = arith.constant 0 : index
    %113 = vector.load %arg5[%c2_82, %c2_83, %c0_84] : memref<10x10x4xf32, #tpu.memory_space<vmem>>, vector<1x8x4xf32>
    %114 = vector.shape_cast %113 : vector<1x8x4xf32> to vector<8x4xf32>
    %c3_85 = arith.constant 3 : index
    %c0_86 = arith.constant 0 : index
    %c0_87 = arith.constant 0 : index
    %115 = vector.load %arg5[%c3_85, %c0_86, %c0_87] : memref<10x10x4xf32, #tpu.memory_space<vmem>>, vector<1x8x4xf32>
    %116 = vector.shape_cast %115 : vector<1x8x4xf32> to vector<8x4xf32>
    %c3_88 = arith.constant 3 : index
    %c1_89 = arith.constant 1 : index
    %c0_90 = arith.constant 0 : index
    %117 = vector.load %arg5[%c3_88, %c1_89, %c0_90] : memref<10x10x4xf32, #tpu.memory_space<vmem>>, vector<1x8x4xf32>
    %118 = vector.shape_cast %117 : vector<1x8x4xf32> to vector<8x4xf32>
    %c3_91 = arith.constant 3 : index
    %c2_92 = arith.constant 2 : index
    %c0_93 = arith.constant 0 : index
    %119 = vector.load %arg5[%c3_91, %c2_92, %c0_93] : memref<10x10x4xf32, #tpu.memory_space<vmem>>, vector<1x8x4xf32>
    %120 = vector.shape_cast %119 : vector<1x8x4xf32> to vector<8x4xf32>
    %c4_94 = arith.constant 4 : index
    %c0_95 = arith.constant 0 : index
    %c0_96 = arith.constant 0 : index
    %121 = vector.load %arg5[%c4_94, %c0_95, %c0_96] : memref<10x10x4xf32, #tpu.memory_space<vmem>>, vector<1x8x4xf32>
    %122 = vector.shape_cast %121 : vector<1x8x4xf32> to vector<8x4xf32>
    %c4_97 = arith.constant 4 : index
    %c1_98 = arith.constant 1 : index
    %c0_99 = arith.constant 0 : index
    %123 = vector.load %arg5[%c4_97, %c1_98, %c0_99] : memref<10x10x4xf32, #tpu.memory_space<vmem>>, vector<1x8x4xf32>
    %124 = vector.shape_cast %123 : vector<1x8x4xf32> to vector<8x4xf32>
    %c4_100 = arith.constant 4 : index
    %c2_101 = arith.constant 2 : index
    %c0_102 = arith.constant 0 : index
    %125 = vector.load %arg5[%c4_100, %c2_101, %c0_102] : memref<10x10x4xf32, #tpu.memory_space<vmem>>, vector<1x8x4xf32>
    %126 = vector.shape_cast %125 : vector<1x8x4xf32> to vector<8x4xf32>
    %127 = tpu.concatenate %110, %112, %114, %116, %118, %120, %122, %124, %126 in 1 : vector<8x4xf32>, vector<8x4xf32>, vector<8x4xf32>, vector<8x4xf32>, vector<8x4xf32>, vector<8x4xf32>, vector<8x4xf32>, vector<8x4xf32>, vector<8x4xf32> -> vector<8x36xf32>
    %c3_103 = arith.constant 3 : index
    %c0_104 = arith.constant 0 : index
    %c0_105 = arith.constant 0 : index
    %128 = vector.load %arg5[%c3_103, %c0_104, %c0_105] : memref<10x10x4xf32, #tpu.memory_space<vmem>>, vector<1x8x4xf32>
    %129 = vector.shape_cast %128 : vector<1x8x4xf32> to vector<8x4xf32>
    %c3_106 = arith.constant 3 : index
    %c1_107 = arith.constant 1 : index
    %c0_108 = arith.constant 0 : index
    %130 = vector.load %arg5[%c3_106, %c1_107, %c0_108] : memref<10x10x4xf32, #tpu.memory_space<vmem>>, vector<1x8x4xf32>
    %131 = vector.shape_cast %130 : vector<1x8x4xf32> to vector<8x4xf32>
    %c3_109 = arith.constant 3 : index
    %c2_110 = arith.constant 2 : index
    %c0_111 = arith.constant 0 : index
    %132 = vector.load %arg5[%c3_109, %c2_110, %c0_111] : memref<10x10x4xf32, #tpu.memory_space<vmem>>, vector<1x8x4xf32>
    %133 = vector.shape_cast %132 : vector<1x8x4xf32> to vector<8x4xf32>
    %c4_112 = arith.constant 4 : index
    %c0_113 = arith.constant 0 : index
    %c0_114 = arith.constant 0 : index
    %134 = vector.load %arg5[%c4_112, %c0_113, %c0_114] : memref<10x10x4xf32, #tpu.memory_space<vmem>>, vector<1x8x4xf32>
    %135 = vector.shape_cast %134 : vector<1x8x4xf32> to vector<8x4xf32>
    %c4_115 = arith.constant 4 : index
    %c1_116 = arith.constant 1 : index
    %c0_117 = arith.constant 0 : index
    %136 = vector.load %arg5[%c4_115, %c1_116, %c0_117] : memref<10x10x4xf32, #tpu.memory_space<vmem>>, vector<1x8x4xf32>
    %137 = vector.shape_cast %136 : vector<1x8x4xf32> to vector<8x4xf32>
    %c4_118 = arith.constant 4 : index
    %c2_119 = arith.constant 2 : index
    %c0_120 = arith.constant 0 : index
    %138 = vector.load %arg5[%c4_118, %c2_119, %c0_120] : memref<10x10x4xf32, #tpu.memory_space<vmem>>, vector<1x8x4xf32>
    %139 = vector.shape_cast %138 : vector<1x8x4xf32> to vector<8x4xf32>
    %c5_121 = arith.constant 5 : index
    %c0_122 = arith.constant 0 : index
    %c0_123 = arith.constant 0 : index
    %140 = vector.load %arg5[%c5_121, %c0_122, %c0_123] : memref<10x10x4xf32, #tpu.memory_space<vmem>>, vector<1x8x4xf32>
    %141 = vector.shape_cast %140 : vector<1x8x4xf32> to vector<8x4xf32>
    %c5_124 = arith.constant 5 : index
    %c1_125 = arith.constant 1 : index
    %c0_126 = arith.constant 0 : index
    %142 = vector.load %arg5[%c5_124, %c1_125, %c0_126] : memref<10x10x4xf32, #tpu.memory_space<vmem>>, vector<1x8x4xf32>
    %143 = vector.shape_cast %142 : vector<1x8x4xf32> to vector<8x4xf32>
    %c5_127 = arith.constant 5 : index
    %c2_128 = arith.constant 2 : index
    %c0_129 = arith.constant 0 : index
    %144 = vector.load %arg5[%c5_127, %c2_128, %c0_129] : memref<10x10x4xf32, #tpu.memory_space<vmem>>, vector<1x8x4xf32>
    %145 = vector.shape_cast %144 : vector<1x8x4xf32> to vector<8x4xf32>
    %146 = tpu.concatenate %129, %131, %133, %135, %137, %139, %141, %143, %145 in 1 : vector<8x4xf32>, vector<8x4xf32>, vector<8x4xf32>, vector<8x4xf32>, vector<8x4xf32>, vector<8x4xf32>, vector<8x4xf32>, vector<8x4xf32>, vector<8x4xf32> -> vector<8x36xf32>
    %c4_130 = arith.constant 4 : index
    %c0_131 = arith.constant 0 : index
    %c0_132 = arith.constant 0 : index
    %147 = vector.load %arg5[%c4_130, %c0_131, %c0_132] : memref<10x10x4xf32, #tpu.memory_space<vmem>>, vector<1x8x4xf32>
    %148 = vector.shape_cast %147 : vector<1x8x4xf32> to vector<8x4xf32>
    %c4_133 = arith.constant 4 : index
    %c1_134 = arith.constant 1 : index
    %c0_135 = arith.constant 0 : index
    %149 = vector.load %arg5[%c4_133, %c1_134, %c0_135] : memref<10x10x4xf32, #tpu.memory_space<vmem>>, vector<1x8x4xf32>
    %150 = vector.shape_cast %149 : vector<1x8x4xf32> to vector<8x4xf32>
    %c4_136 = arith.constant 4 : index
    %c2_137 = arith.constant 2 : index
    %c0_138 = arith.constant 0 : index
    %151 = vector.load %arg5[%c4_136, %c2_137, %c0_138] : memref<10x10x4xf32, #tpu.memory_space<vmem>>, vector<1x8x4xf32>
    %152 = vector.shape_cast %151 : vector<1x8x4xf32> to vector<8x4xf32>
    %c5_139 = arith.constant 5 : index
    %c0_140 = arith.constant 0 : index
    %c0_141 = arith.constant 0 : index
    %153 = vector.load %arg5[%c5_139, %c0_140, %c0_141] : memref<10x10x4xf32, #tpu.memory_space<vmem>>, vector<1x8x4xf32>
    %154 = vector.shape_cast %153 : vector<1x8x4xf32> to vector<8x4xf32>
    %c5_142 = arith.constant 5 : index
    %c1_143 = arith.constant 1 : index
    %c0_144 = arith.constant 0 : index
    %155 = vector.load %arg5[%c5_142, %c1_143, %c0_144] : memref<10x10x4xf32, #tpu.memory_space<vmem>>, vector<1x8x4xf32>
    %156 = vector.shape_cast %155 : vector<1x8x4xf32> to vector<8x4xf32>
    %c5_145 = arith.constant 5 : index
    %c2_146 = arith.constant 2 : index
    %c0_147 = arith.constant 0 : index
    %157 = vector.load %arg5[%c5_145, %c2_146, %c0_147] : memref<10x10x4xf32, #tpu.memory_space<vmem>>, vector<1x8x4xf32>
    %158 = vector.shape_cast %157 : vector<1x8x4xf32> to vector<8x4xf32>
    %c6_148 = arith.constant 6 : index
    %c0_149 = arith.constant 0 : index
    %c0_150 = arith.constant 0 : index
    %159 = vector.load %arg5[%c6_148, %c0_149, %c0_150] : memref<10x10x4xf32, #tpu.memory_space<vmem>>, vector<1x8x4xf32>
    %160 = vector.shape_cast %159 : vector<1x8x4xf32> to vector<8x4xf32>
    %c6_151 = arith.constant 6 : index
    %c1_152 = arith.constant 1 : index
    %c0_153 = arith.constant 0 : index
    %161 = vector.load %arg5[%c6_151, %c1_152, %c0_153] : memref<10x10x4xf32, #tpu.memory_space<vmem>>, vector<1x8x4xf32>
    %162 = vector.shape_cast %161 : vector<1x8x4xf32> to vector<8x4xf32>
    %c6_154 = arith.constant 6 : index
    %c2_155 = arith.constant 2 : index
    %c0_156 = arith.constant 0 : index
    %163 = vector.load %arg5[%c6_154, %c2_155, %c0_156] : memref<10x10x4xf32, #tpu.memory_space<vmem>>, vector<1x8x4xf32>
    %164 = vector.shape_cast %163 : vector<1x8x4xf32> to vector<8x4xf32>
    %165 = tpu.concatenate %148, %150, %152, %154, %156, %158, %160, %162, %164 in 1 : vector<8x4xf32>, vector<8x4xf32>, vector<8x4xf32>, vector<8x4xf32>, vector<8x4xf32>, vector<8x4xf32>, vector<8x4xf32>, vector<8x4xf32>, vector<8x4xf32> -> vector<8x36xf32>
    %c5_157 = arith.constant 5 : index
    %c0_158 = arith.constant 0 : index
    %c0_159 = arith.constant 0 : index
    %166 = vector.load %arg5[%c5_157, %c0_158, %c0_159] : memref<10x10x4xf32, #tpu.memory_space<vmem>>, vector<1x8x4xf32>
    %167 = vector.shape_cast %166 : vector<1x8x4xf32> to vector<8x4xf32>
    %c5_160 = arith.constant 5 : index
    %c1_161 = arith.constant 1 : index
    %c0_162 = arith.constant 0 : index
    %168 = vector.load %arg5[%c5_160, %c1_161, %c0_162] : memref<10x10x4xf32, #tpu.memory_space<vmem>>, vector<1x8x4xf32>
    %169 = vector.shape_cast %168 : vector<1x8x4xf32> to vector<8x4xf32>
    %c5_163 = arith.constant 5 : index
    %c2_164 = arith.constant 2 : index
    %c0_165 = arith.constant 0 : index
    %170 = vector.load %arg5[%c5_163, %c2_164, %c0_165] : memref<10x10x4xf32, #tpu.memory_space<vmem>>, vector<1x8x4xf32>
    %171 = vector.shape_cast %170 : vector<1x8x4xf32> to vector<8x4xf32>
    %c6_166 = arith.constant 6 : index
    %c0_167 = arith.constant 0 : index
    %c0_168 = arith.constant 0 : index
    %172 = vector.load %arg5[%c6_166, %c0_167, %c0_168] : memref<10x10x4xf32, #tpu.memory_space<vmem>>, vector<1x8x4xf32>
    %173 = vector.shape_cast %172 : vector<1x8x4xf32> to vector<8x4xf32>
    %c6_169 = arith.constant 6 : index
    %c1_170 = arith.constant 1 : index
    %c0_171 = arith.constant 0 : index
    %174 = vector.load %arg5[%c6_169, %c1_170, %c0_171] : memref<10x10x4xf32, #tpu.memory_space<vmem>>, vector<1x8x4xf32>
    %175 = vector.shape_cast %174 : vector<1x8x4xf32> to vector<8x4xf32>
    %c6_172 = arith.constant 6 : index
    %c2_173 = arith.constant 2 : index
    %c0_174 = arith.constant 0 : index
    %176 = vector.load %arg5[%c6_172, %c2_173, %c0_174] : memref<10x10x4xf32, #tpu.memory_space<vmem>>, vector<1x8x4xf32>
    %177 = vector.shape_cast %176 : vector<1x8x4xf32> to vector<8x4xf32>
    %c7_175 = arith.constant 7 : index
    %c0_176 = arith.constant 0 : index
    %c0_177 = arith.constant 0 : index
    %178 = vector.load %arg5[%c7_175, %c0_176, %c0_177] : memref<10x10x4xf32, #tpu.memory_space<vmem>>, vector<1x8x4xf32>
    %179 = vector.shape_cast %178 : vector<1x8x4xf32> to vector<8x4xf32>
    %c7_178 = arith.constant 7 : index
    %c1_179 = arith.constant 1 : index
    %c0_180 = arith.constant 0 : index
    %180 = vector.load %arg5[%c7_178, %c1_179, %c0_180] : memref<10x10x4xf32, #tpu.memory_space<vmem>>, vector<1x8x4xf32>
    %181 = vector.shape_cast %180 : vector<1x8x4xf32> to vector<8x4xf32>
    %c7_181 = arith.constant 7 : index
    %c2_182 = arith.constant 2 : index
    %c0_183 = arith.constant 0 : index
    %182 = vector.load %arg5[%c7_181, %c2_182, %c0_183] : memref<10x10x4xf32, #tpu.memory_space<vmem>>, vector<1x8x4xf32>
    %183 = vector.shape_cast %182 : vector<1x8x4xf32> to vector<8x4xf32>
    %184 = tpu.concatenate %167, %169, %171, %173, %175, %177, %179, %181, %183 in 1 : vector<8x4xf32>, vector<8x4xf32>, vector<8x4xf32>, vector<8x4xf32>, vector<8x4xf32>, vector<8x4xf32>, vector<8x4xf32>, vector<8x4xf32>, vector<8x4xf32> -> vector<8x36xf32>
    %c6_184 = arith.constant 6 : index
    %c0_185 = arith.constant 0 : index
    %c0_186 = arith.constant 0 : index
    %185 = vector.load %arg5[%c6_184, %c0_185, %c0_186] : memref<10x10x4xf32, #tpu.memory_space<vmem>>, vector<1x8x4xf32>
    %186 = vector.shape_cast %185 : vector<1x8x4xf32> to vector<8x4xf32>
    %c6_187 = arith.constant 6 : index
    %c1_188 = arith.constant 1 : index
    %c0_189 = arith.constant 0 : index
    %187 = vector.load %arg5[%c6_187, %c1_188, %c0_189] : memref<10x10x4xf32, #tpu.memory_space<vmem>>, vector<1x8x4xf32>
    %188 = vector.shape_cast %187 : vector<1x8x4xf32> to vector<8x4xf32>
    %c6_190 = arith.constant 6 : index
    %c2_191 = arith.constant 2 : index
    %c0_192 = arith.constant 0 : index
    %189 = vector.load %arg5[%c6_190, %c2_191, %c0_192] : memref<10x10x4xf32, #tpu.memory_space<vmem>>, vector<1x8x4xf32>
    %190 = vector.shape_cast %189 : vector<1x8x4xf32> to vector<8x4xf32>
    %c7_193 = arith.constant 7 : index
    %c0_194 = arith.constant 0 : index
    %c0_195 = arith.constant 0 : index
    %191 = vector.load %arg5[%c7_193, %c0_194, %c0_195] : memref<10x10x4xf32, #tpu.memory_space<vmem>>, vector<1x8x4xf32>
    %192 = vector.shape_cast %191 : vector<1x8x4xf32> to vector<8x4xf32>
    %c7_196 = arith.constant 7 : index
    %c1_197 = arith.constant 1 : index
    %c0_198 = arith.constant 0 : index
    %193 = vector.load %arg5[%c7_196, %c1_197, %c0_198] : memref<10x10x4xf32, #tpu.memory_space<vmem>>, vector<1x8x4xf32>
    %194 = vector.shape_cast %193 : vector<1x8x4xf32> to vector<8x4xf32>
    %c7_199 = arith.constant 7 : index
    %c2_200 = arith.constant 2 : index
    %c0_201 = arith.constant 0 : index
    %195 = vector.load %arg5[%c7_199, %c2_200, %c0_201] : memref<10x10x4xf32, #tpu.memory_space<vmem>>, vector<1x8x4xf32>
    %196 = vector.shape_cast %195 : vector<1x8x4xf32> to vector<8x4xf32>
    %c8_202 = arith.constant 8 : index
    %c0_203 = arith.constant 0 : index
    %c0_204 = arith.constant 0 : index
    %197 = vector.load %arg5[%c8_202, %c0_203, %c0_204] : memref<10x10x4xf32, #tpu.memory_space<vmem>>, vector<1x8x4xf32>
    %198 = vector.shape_cast %197 : vector<1x8x4xf32> to vector<8x4xf32>
    %c8_205 = arith.constant 8 : index
    %c1_206 = arith.constant 1 : index
    %c0_207 = arith.constant 0 : index
    %199 = vector.load %arg5[%c8_205, %c1_206, %c0_207] : memref<10x10x4xf32, #tpu.memory_space<vmem>>, vector<1x8x4xf32>
    %200 = vector.shape_cast %199 : vector<1x8x4xf32> to vector<8x4xf32>
    %c8_208 = arith.constant 8 : index
    %c2_209 = arith.constant 2 : index
    %c0_210 = arith.constant 0 : index
    %201 = vector.load %arg5[%c8_208, %c2_209, %c0_210] : memref<10x10x4xf32, #tpu.memory_space<vmem>>, vector<1x8x4xf32>
    %202 = vector.shape_cast %201 : vector<1x8x4xf32> to vector<8x4xf32>
    %203 = tpu.concatenate %186, %188, %190, %192, %194, %196, %198, %200, %202 in 1 : vector<8x4xf32>, vector<8x4xf32>, vector<8x4xf32>, vector<8x4xf32>, vector<8x4xf32>, vector<8x4xf32>, vector<8x4xf32>, vector<8x4xf32>, vector<8x4xf32> -> vector<8x36xf32>
    %c7_211 = arith.constant 7 : index
    %c0_212 = arith.constant 0 : index
    %c0_213 = arith.constant 0 : index
    %204 = vector.load %arg5[%c7_211, %c0_212, %c0_213] : memref<10x10x4xf32, #tpu.memory_space<vmem>>, vector<1x8x4xf32>
    %205 = vector.shape_cast %204 : vector<1x8x4xf32> to vector<8x4xf32>
    %c7_214 = arith.constant 7 : index
    %c1_215 = arith.constant 1 : index
    %c0_216 = arith.constant 0 : index
    %206 = vector.load %arg5[%c7_214, %c1_215, %c0_216] : memref<10x10x4xf32, #tpu.memory_space<vmem>>, vector<1x8x4xf32>
    %207 = vector.shape_cast %206 : vector<1x8x4xf32> to vector<8x4xf32>
    %c7_217 = arith.constant 7 : index
    %c2_218 = arith.constant 2 : index
    %c0_219 = arith.constant 0 : index
    %208 = vector.load %arg5[%c7_217, %c2_218, %c0_219] : memref<10x10x4xf32, #tpu.memory_space<vmem>>, vector<1x8x4xf32>
    %209 = vector.shape_cast %208 : vector<1x8x4xf32> to vector<8x4xf32>
    %c8_220 = arith.constant 8 : index
    %c0_221 = arith.constant 0 : index
    %c0_222 = arith.constant 0 : index
    %210 = vector.load %arg5[%c8_220, %c0_221, %c0_222] : memref<10x10x4xf32, #tpu.memory_space<vmem>>, vector<1x8x4xf32>
    %211 = vector.shape_cast %210 : vector<1x8x4xf32> to vector<8x4xf32>
    %c8_223 = arith.constant 8 : index
    %c1_224 = arith.constant 1 : index
    %c0_225 = arith.constant 0 : index
    %212 = vector.load %arg5[%c8_223, %c1_224, %c0_225] : memref<10x10x4xf32, #tpu.memory_space<vmem>>, vector<1x8x4xf32>
    %213 = vector.shape_cast %212 : vector<1x8x4xf32> to vector<8x4xf32>
    %c8_226 = arith.constant 8 : index
    %c2_227 = arith.constant 2 : index
    %c0_228 = arith.constant 0 : index
    %214 = vector.load %arg5[%c8_226, %c2_227, %c0_228] : memref<10x10x4xf32, #tpu.memory_space<vmem>>, vector<1x8x4xf32>
    %215 = vector.shape_cast %214 : vector<1x8x4xf32> to vector<8x4xf32>
    %c9 = arith.constant 9 : index
    %c0_229 = arith.constant 0 : index
    %c0_230 = arith.constant 0 : index
    %216 = vector.load %arg5[%c9, %c0_229, %c0_230] : memref<10x10x4xf32, #tpu.memory_space<vmem>>, vector<1x8x4xf32>
    %217 = vector.shape_cast %216 : vector<1x8x4xf32> to vector<8x4xf32>
    %c9_231 = arith.constant 9 : index
    %c1_232 = arith.constant 1 : index
    %c0_233 = arith.constant 0 : index
    %218 = vector.load %arg5[%c9_231, %c1_232, %c0_233] : memref<10x10x4xf32, #tpu.memory_space<vmem>>, vector<1x8x4xf32>
    %219 = vector.shape_cast %218 : vector<1x8x4xf32> to vector<8x4xf32>
    %c9_234 = arith.constant 9 : index
    %c2_235 = arith.constant 2 : index
    %c0_236 = arith.constant 0 : index
    %220 = vector.load %arg5[%c9_234, %c2_235, %c0_236] : memref<10x10x4xf32, #tpu.memory_space<vmem>>, vector<1x8x4xf32>
    %221 = vector.shape_cast %220 : vector<1x8x4xf32> to vector<8x4xf32>
    %222 = tpu.concatenate %205, %207, %209, %211, %213, %215, %217, %219, %221 in 1 : vector<8x4xf32>, vector<8x4xf32>, vector<8x4xf32>, vector<8x4xf32>, vector<8x4xf32>, vector<8x4xf32>, vector<8x4xf32>, vector<8x4xf32>, vector<8x4xf32> -> vector<8x36xf32>
    %223 = tpu.concatenate %89, %108, %127, %146, %165, %184, %203, %222 in 0 : vector<8x36xf32>, vector<8x36xf32>, vector<8x36xf32>, vector<8x36xf32>, vector<8x36xf32>, vector<8x36xf32>, vector<8x36xf32>, vector<8x36xf32> -> vector<64x36xf32>
    %c0_237 = arith.constant 0 : index
    %c0_238 = arith.constant 0 : index
    %224 = vector.load %arg2[%c0_237, %c0_238] : memref<36x128xf32, #tpu.memory_space<vmem>>, vector<36x128xf32>
    %cst_239 = arith.constant dense<0.000000e+00> : vector<64x128xf32>
    %225 = tpu.matmul %223, %224, %cst_239 {dimension_numbers = #tpu.dot_dimension_numbers<[1], [0], [0], [1], [0, 0, 1, 1], [], []>} : vector<64x36xf32>, vector<36x128xf32>, vector<64x128xf32> -> vector<64x128xf32>
    %c0_240 = arith.constant 0 : index
    %c0_241 = arith.constant 0 : index
    %226 = vector.load %arg3[%c0_240, %c0_241] : memref<64x128xf32, #tpu.memory_space<vmem>>, vector<64x128xf32>
    tpu.vector_store %arg3[%c0_240, %c0_241], %225 {strides = array<i32>} : memref<64x128xf32, #tpu.memory_space<vmem>>, vector<64x128xf32>,
    %c0_i32 = arith.constant 0 : i32
    %227 = arith.cmpi eq, %arg0, %c0_i32 : i32
    %228 = arith.extui %227 : i1 to i32
    %c0_i32_242 = arith.constant 0 : i32
    %229 = arith.cmpi ne, %228, %c0_i32_242 : i32
    scf.if %229 {
      %cst_249 = arith.constant 0.000000e+00 : f32
      %239 = vector.broadcast %cst_249 : f32 to vector<2x128xf32>
      %c0_250 = arith.constant 0 : index
      %c0_251 = arith.constant 0 : index
      %240 = vector.load %arg4[%c0_250, %c0_251] : memref<2x128xf32, #tpu.memory_space<vmem>>, vector<2x128xf32>
      tpu.vector_store %arg4[%c0_250, %c0_251], %239 {strides = array<i32>} : memref<2x128xf32, #tpu.memory_space<vmem>>, vector<2x128xf32>,
    } else {
    }
    %c0_243 = arith.constant 0 : index
    %c0_244 = arith.constant 0 : index
    %230 = vector.load %arg4[%c0_243, %c0_244] : memref<2x128xf32, #tpu.memory_space<vmem>>, vector<2x128xf32>
    %cst_245 = arith.constant dense<0.000000e+00> : vector<128xf32>
    %231 = vector.multi_reduction <add>, %225, %cst_245 [0] : vector<64x128xf32> to vector<128xf32>
    %232 = vector.shape_cast %231 : vector<128xf32> to vector<1x128xf32>
    %233 = arith.mulf %225, %225 : vector<64x128xf32>
    %cst_246 = arith.constant dense<0.000000e+00> : vector<128xf32>
    %234 = vector.multi_reduction <add>, %233, %cst_246 [0] : vector<64x128xf32> to vector<128xf32>
    %235 = vector.shape_cast %234 : vector<128xf32> to vector<1x128xf32>
    %236 = tpu.concatenate %232, %235 in 0 : vector<1x128xf32>, vector<1x128xf32> -> vector<2x128xf32>
    %237 = arith.addf %230, %236 : vector<2x128xf32>
    %c0_247 = arith.constant 0 : index
    %c0_248 = arith.constant 0 : index
    %238 = vector.load %arg4[%c0_247, %c0_248] : memref<2x128xf32, #tpu.memory_space<vmem>>, vector<2x128xf32>
    tpu.vector_store %arg4[%c0_247, %c0_248], %237 {strides = array<i32>} : memref<2x128xf32, #tpu.memory_space<vmem>>, vector<2x128xf32>,
    return
  }
  func.func @transform_0(%arg0: i32) -> (i32, i32, i32, i32) {
    %c0_i32 = arith.constant 0 : i32
    %c0_i32_0 = arith.constant 0 : i32
    %c0_i32_1 = arith.constant 0 : i32
    %c0_i32_2 = arith.constant 0 : i32
    return %arg0, %c0_i32, %c0_i32_0, %c0_i32_1 : i32, i32, i32, i32
  }
  func.func @transform_1(%arg0: i32) -> (i32, i32) {
    %c0_i32 = arith.constant 0 : i32
    %c0_i32_0 = arith.constant 0 : i32
    %c0_i32_1 = arith.constant 0 : i32
    return %c0_i32, %c0_i32_0 : i32, i32
  }
  func.func @transform_2(%arg0: i32) -> (i32, i32) {
    %c0_i32 = arith.constant 0 : i32
    %c0_i32_0 = arith.constant 0 : i32
    return %arg0, %c0_i32 : i32, i32
  }
  func.func @transform_3(%arg0: i32) -> (i32, i32) {
    %c0_i32 = arith.constant 0 : i32
    %c0_i32_0 = arith.constant 0 : i32
    %c0_i32_1 = arith.constant 0 : i32
    return %c0_i32, %c0_i32_0 : i32, i32
  }
}

</mosaic_0001>

<llo_original>
// kernel: tpu_custom_call.1
$region0: #{tpu_custom_call.1}
  #allocation0 [shape = 'u32[]', space=smem, size = 0x4, offset = 0x4, fixed_abs, tag = 'smem constant byte address 0x4 - core index']
  #allocation1 [shape = 'u32[144,128]{1,0:T(1,128)}', space=vmem, size = 0x12000, scoped, tag = 'internal scratch']
  #allocation2 [shape = 'f32[10,10,4]{2,1,0:T(8,128)}', space=vmem, size = 0x14000, scoped, tag = 'scratch operand']
  %s0 = inlined_call_operand.vmem [shape: f32[2,16,8,8], index: 0, kind: input, shape index: {}]
  %s1 = inlined_call_operand.vmem [shape: f32[36,128], index: 1, kind: input, shape index: {}]
  %s2 = inlined_call_operand.hbm [shape: f32[128,128], index: 2, kind: output, shape index: {0}]
  %s3 = inlined_call_operand.hbm [shape: f32[2,128], index: 3, kind: output, shape index: {1}]
  %4 = xla_tuple %s2, %s3
  %s5 = sld [smem:[#allocation0]]
  $region53: #{tpu_custom_call.1} parent=0
    _
  %s7 = ssub.s32 1, %s5
  %s8 = scalar_select 0, %s7, %s5
  $region1: #{tpu_custom_call.1} parent=0
    #allocation3 [shape = 'u8[65536]{0}', space=vmem, size = 0x10000, scoped, tag = 'output window, operand 0']
    #allocation4 [shape = 's32[2]{0}', space=sflag, size = 0x8, scoped, tag = 'scoped memory for tpu_custom_call.1']
    #allocation5 [shape = 'u8[1024]{0}', space=vmem, size = 0x400, scoped, tag = 'output window, operand 1, single buffered']
    #allocation6 [shape = 's32[1]{0}', space=sflag, size = 0x4, scoped, tag = 'scoped memory for tpu_custom_call.1']
    %9 = vsyncpa [#allocation4], 0
    %s10 = scalar_lea.sflag [#allocation4], 1
    %11 = vsyncpa %s10, 0
    %12 = vsyncpa [#allocation6], 0
    loop: start=0, step=1, limit=4
    $region2: #{tpu_custom_call.1} parent=1 // loop_pre_header
      _
    $region3: #{tpu_custom_call.1} parent=1 // loop_header
      %s14 = sphi 0, %s18
      %p15 = scmp.ge.s32.totalorder %s14, 4
      %s24 = sphi 0, %s26
      %s27 = sphi 0, %s24
      %s28 = sphi 0, %s27
      %s44 = sphi 0, %s28
      %s48 = sphi 0, %s48
      %s50 = sphi 0, %s48
      %s51 = sphi 0, %s50
      %s65 = sphi 0, %s51
      %s71 = sphi 0, %s73
      %s74 = sphi 0, %s71
      %s75 = sphi 0, %s74
      %s91 = sphi 0, %s75
      %s95 = sphi 0, %s95
      %s97 = sphi 0, %s95
      %s98 = sphi 0, %s97
      %s112 = sphi 0, %s98
    $region4: #{tpu_custom_call.1} parent=1 // loop_header_branch
      %17 = sbr.rel (%p15) target = $region8
    $region5: #{tpu_custom_call.1} parent=1 // loop_body
      %s19 = ssub.s32 %s14, 1
      %s20 = ssub.s32 %s14, 2
      %s21 = sadd.s32 %s14, 1
      %s22 = ssub.s32 %s14, %s21
      %p23 = scmp.eq.s32.totalorder %s22, 0
      %s25 = sadd.s32 %s24, 1
      %s26 = scalar_select %p23, %s24, %s25
      %p29 = pneg %p23
      %p30 = scmp.eq.s32.totalorder %s14, 1
      %p31 = por %p29, %p30
      %p32 = scmp.ne.s32.totalorder %s24, %s27
      %p33 = scmp.eq.s32.totalorder %s14, 0
      %p34 = por %p32, %p33
      %p35 = scmp.ne.s32.totalorder %s24, %s27
      %p36 = scmp.eq.s32.totalorder %s19, 1
      %p37 = por %p35, %p36
      %p38 = scmp.ne.s32.totalorder %s27, %s28
      %p39 = scmp.eq.s32.totalorder %s19, 0
      %p40 = por %p38, %p39
      %p41 = scmp.ne.s32.totalorder %s27, %s28
      %p42 = scmp.eq.s32.totalorder %s20, 1
      %p43 = por %p41, %p42
      %p45 = scmp.ne.s32.totalorder %s28, %s44
      %p46 = scmp.eq.s32.totalorder %s20, 0
      %p47 = por %p45, %p46
      %s49 = sadd.s32 %s48, 1
      %p52 = scmp.eq.s32.totalorder %s14, 1
      %p53 = scmp.ne.s32.totalorder %s48, %s50
      %p54 = scmp.eq.s32.totalorder %s14, 0
      %p55 = por %p53, %p54
      %p56 = scmp.ne.s32.totalorder %s48, %s50
      %p57 = scmp.eq.s32.totalorder %s19, 1
      %p58 = por %p56, %p57
      %p59 = scmp.ne.s32.totalorder %s50, %s51
      %p60 = scmp.eq.s32.totalorder %s19, 0
      %p61 = por %p59, %p60
      %p62 = scmp.ne.s32.totalorder %s50, %s51
      %p63 = scmp.eq.s32.totalorder %s20, 1
      %p64 = por %p62, %p63
      %p66 = scmp.ne.s32.totalorder %s51, %s65
      %p67 = scmp.eq.s32.totalorder %s20, 0
      %p68 = por %p66, %p67
      %s69 = ssub.s32 %s14, %s21
      %p70 = scmp.eq.s32.totalorder %s69, 0
      %s72 = sadd.s32 %s71, 1
      %s73 = scalar_select %p70, %s71, %s72
      %p76 = pneg %p70
      %p77 = scmp.eq.s32.totalorder %s14, 1
      %p78 = por %p76, %p77
      %p79 = scmp.ne.s32.totalorder %s71, %s74
      %p80 = scmp.eq.s32.totalorder %s14, 0
      %p81 = por %p79, %p80
      %p82 = scmp.ne.s32.totalorder %s71, %s74
      %p83 = scmp.eq.s32.totalorder %s19, 1
      %p84 = por %p82, %p83
      %p85 = scmp.ne.s32.totalorder %s74, %s75
      %p86 = scmp.eq.s32.totalorder %s19, 0
      %p87 = por %p85, %p86
      %p88 = scmp.ne.s32.totalorder %s74, %s75
      %p89 = scmp.eq.s32.totalorder %s20, 1
      %p90 = por %p88, %p89
      %p92 = scmp.ne.s32.totalorder %s75, %s91
      %p93 = scmp.eq.s32.totalorder %s20, 0
      %p94 = por %p92, %p93
      %s96 = sadd.s32 %s95, 1
      %p99 = scmp.eq.s32.totalorder %s14, 1
      %p100 = scmp.ne.s32.totalorder %s95, %s97
      %p101 = scmp.eq.s32.totalorder %s14, 0
      %p102 = por %p100, %p101
      %p103 = scmp.ne.s32.totalorder %s95, %s97
      %p104 = scmp.eq.s32.totalorder %s19, 1
      %p105 = por %p103, %p104
      %p106 = scmp.ne.s32.totalorder %s97, %s98
      %p107 = scmp.eq.s32.totalorder %s19, 0
      %p108 = por %p106, %p107
      %p109 = scmp.ne.s32.totalorder %s97, %s98
      %p110 = scmp.eq.s32.totalorder %s20, 1
      %p111 = por %p109, %p110
      %p113 = scmp.ne.s32.totalorder %s98, %s112
      %p114 = scmp.eq.s32.totalorder %s20, 0
      %p115 = por %p113, %p114
      %p116 = scmp.le.s32.totalorder 1, %s14
      %p117 = scmp.lt.s32.totalorder %s14, 3
      %p118 = pnand %p116, %p117
      %p119 = pneg %p118
      // Predicated region
      $region9: #{tpu_custom_call.1} parent=5 // pred_check
        _
      $region10: #{tpu_custom_call.1} parent=5 // pred_check_branch
        %121 = sbr.rel (%p118) target = $region12
      $region11: #{tpu_custom_call.1} parent=5 // pred_region
        %s122 = ssub.s32 %s14, 1
        // Predicated region
        $region13: #{tpu_custom_call.1} parent=11 // pred_check
          %p123 = pneg %p61
        $region14: #{tpu_custom_call.1} parent=11 // pred_check_branch
          %125 = sbr.rel (%p123) target = $region16
        $region15: #{tpu_custom_call.1} parent=11 // pred_region
          _
        $region16: #{tpu_custom_call.1} parent=11 // pred_fallthru
          _
      $region12: #{tpu_custom_call.1} parent=5 // pred_fallthru
        _
      %p126 = scmp.lt.s32.totalorder %s14, 2
      // Predicated region
      $region17: #{tpu_custom_call.1} parent=5 // pred_check
        %p127 = pneg %p126
      $region18: #{tpu_custom_call.1} parent=5 // pred_check_branch
        %129 = sbr.rel (%p127) target = $region20
      $region19: #{tpu_custom_call.1} parent=5 // pred_region
        // Predicated region
        $region21: #{tpu_custom_call.1} parent=19 // pred_check
          %p130 = pneg %p34
        $region22: #{tpu_custom_call.1} parent=19 // pred_check_branch
          %132 = sbr.rel (%p130) target = $region24
        $region23: #{tpu_custom_call.1} parent=19 // pred_region
          %p133 = scmp.lt.s32.totalorder %s14, 1
          %s134 = scalar_select %p133, %s14, 1
          %s135 = smul.addr %s134, 16
          %s136 = smul.addr %s135, 8
          %s137 = scalar_lea.vmem %s0, %s136
        $region24: #{tpu_custom_call.1} parent=19 // pred_fallthru
          _
      $region20: #{tpu_custom_call.1} parent=5 // pred_fallthru
        _
      %p138 = scmp.le.s32.totalorder 1, %s14
      %p139 = scmp.lt.s32.totalorder %s14, 3
      %p140 = pnand %p138, %p139
      %p141 = pneg %p140
      // Predicated region
      $region25: #{tpu_custom_call.1} parent=5 // pred_check
        _
      $region26: #{tpu_custom_call.1} parent=5 // pred_check_branch
        %143 = sbr.rel (%p140) target = $region28
      $region27: #{tpu_custom_call.1} parent=5 // pred_region
        %s144 = ssub.s32 %s14, 1
        %p145 = scmp.lt.s32.totalorder %s19, 1
        %s146 = scalar_select %p145, %s19, 1
        %s147 = smul.addr %s146, 16
        %s148 = smul.addr %s147, 8
        %s149 = scalar_lea.vmem %s0, %s148
        %p150 = pneg %p40
        %p151 = pneg %p37
        %p152 = pneg %p61
        %p153 = pneg %p58
        %p154 = pneg %p87
        %p155 = pneg %p84
        %s156 = sand.u32 %s74, 1
        %s157 = scalar_lea.sflag [#allocation4], %s156
        %s158 = sand.u32 %s74, 1
        %s159 = smul.addr %s158, 64
        %s160 = scalar_lea.vmem [#allocation3], %s159
        %p161 = pneg %p108
        %p162 = pneg %p105
        %p163 = scmp.lt.s32.totalorder %s19, 1
        %s164 = scalar_select %p163, %s19, 1
        %s165 = smul.addr %s164, 16
        %s166 = smul.addr %s165, 8
        %s167 = scalar_lea.vmem %s0, %s166
        %s168 = smul.u32 8, %s19
        %v169 = vld [vmem:[%s167] sm:$0xff]
        %v170 = vld [vmem:[%s167 + $0x8] sm:$0xff]
        %v171 = vld [vmem:[%s167 + $0x10] sm:$0xff]
        %v172 = vld [vmem:[%s167 + $0x18] sm:$0xff]
        %v173 = vld [vmem:[%s167 + $0x20] sm:$0xff]
        %v174 = vld [vmem:[%s167 + $0x28] sm:$0xff]
        %v175 = vld [vmem:[%s167 + $0x30] sm:$0xff]
        %v176 = vld [vmem:[%s167 + $0x38] sm:$0xff]
        %v177 = vld [vmem:[%s167 + $0x40] sm:$0xff]
        %v178 = vld [vmem:[%s167 + $0x48] sm:$0xff]
        %v179 = vld [vmem:[%s167 + $0x50] sm:$0xff]
        %v180 = vld [vmem:[%s167 + $0x58] sm:$0xff]
        %v181 = vld [vmem:[%s167 + $0x60] sm:$0xff]
        %v182 = vld [vmem:[%s167 + $0x68] sm:$0xff]
        %v183 = vld [vmem:[%s167 + $0x70] sm:$0xff]
        %v184 = vld [vmem:[%s167 + $0x78] sm:$0xff]
        %201 = vrot.lane.b32.xlu0 %v169, 124
        %v202 = vpop.permute.xlu0 %201
        %203 = vrot.lane.b32.xlu0 %v170, 124
        %v204 = vpop.permute.xlu0 %203
        %205 = vrot.lane.b32.xlu0 %v171, 124
        %v206 = vpop.permute.xlu0 %205
        %207 = vrot.lane.b32.xlu0 %v172, 124
        %v208 = vpop.permute.xlu0 %207
        %209 = vrot.lane.b32.xlu0 %v173, 124
        %v210 = vpop.permute.xlu0 %209
        %211 = vrot.lane.b32.xlu0 %v174, 124
        %v212 = vpop.permute.xlu0 %211
        %213 = vrot.lane.b32.xlu0 %v175, 124
        %v214 = vpop.permute.xlu0 %213
        %215 = vrot.lane.b32.xlu0 %v176, 124
        %v216 = vpop.permute.xlu0 %215
        %217 = vrot.lane.b32.xlu0 %v177, 124
        %v218 = vpop.permute.xlu0 %217
        %219 = vrot.lane.b32.xlu0 %v178, 124
        %v220 = vpop.permute.xlu0 %219
        %221 = vrot.lane.b32.xlu0 %v179, 124
        %v222 = vpop.permute.xlu0 %221
        %223 = vrot.lane.b32.xlu0 %v180, 124
        %v224 = vpop.permute.xlu0 %223
        %225 = vrot.lane.b32.xlu0 %v181, 124
        %v226 = vpop.permute.xlu0 %225
        %227 = vrot.lane.b32.xlu0 %v182, 124
        %v228 = vpop.permute.xlu0 %227
        %229 = vrot.lane.b32.xlu0 %v183, 124
        %v230 = vpop.permute.xlu0 %229
        %231 = vrot.lane.b32.xlu0 %v184, 124
        %v232 = vpop.permute.xlu0 %231
        %v249 = vmax.f32 %v169, %v202
        %v250 = vmax.f32 %v170, %v204
        %v251 = vmax.f32 %v171, %v206
        %v252 = vmax.f32 %v172, %v208
        %v253 = vmax.f32 %v173, %v210
        %v254 = vmax.f32 %v174, %v212
        %v255 = vmax.f32 %v175, %v214
        %v256 = vmax.f32 %v176, %v216
        %v257 = vmax.f32 %v177, %v218
        %v258 = vmax.f32 %v178, %v220
        %v259 = vmax.f32 %v179, %v222
        %v260 = vmax.f32 %v180, %v224
        %v261 = vmax.f32 %v181, %v226
        %v262 = vmax.f32 %v182, %v228
        %v263 = vmax.f32 %v183, %v230
        %v264 = vmax.f32 %v184, %v232
        %vm265 = vcmask 31744
        %266 = vst.msk [vmem:[#allocation2] sm:$0xff] %vm265, 0.0
        %vm267 = vcmask 25600
        %268 = vst.msk [vmem:[#allocation2 + $0x8] sm:$0x3] %vm267, 0.0
        %269 = vst.msk [vmem:[#allocation2 + $0x10] sm:$0xff] %vm265, 0.0
        %270 = vst.msk [vmem:[#allocation2 + $0x18] sm:$0x3] %vm267, 0.0
        %271 = vst.msk [vmem:[#allocation2 + $0x20] sm:$0xff] %vm265, 0.0
        %272 = vst.msk [vmem:[#allocation2 + $0x28] sm:$0x3] %vm267, 0.0
        %273 = vst.msk [vmem:[#allocation2 + $0x30] sm:$0xff] %vm265, 0.0
        %274 = vst.msk [vmem:[#allocation2 + $0x38] sm:$0x3] %vm267, 0.0
        %275 = vst.msk [vmem:[#allocation2 + $0x40] sm:$0xff] %vm265, 0.0
        %276 = vst.msk [vmem:[#allocation2 + $0x48] sm:$0x3] %vm267, 0.0
        %277 = vst.msk [vmem:[#allocation2 + $0x50] sm:$0xff] %vm265, 0.0
        %278 = vst.msk [vmem:[#allocation2 + $0x58] sm:$0x3] %vm267, 0.0
        %279 = vst.msk [vmem:[#allocation2 + $0x60] sm:$0xff] %vm265, 0.0
        %280 = vst.msk [vmem:[#allocation2 + $0x68] sm:$0x3] %vm267, 0.0
        %281 = vst.msk [vmem:[#allocation2 + $0x70] sm:$0xff] %vm265, 0.0
        %282 = vst.msk [vmem:[#allocation2 + $0x78] sm:$0x3] %vm267, 0.0
        %283 = vst.msk [vmem:[#allocation2 + $0x80] sm:$0xff] %vm265, 0.0
        %284 = vst.msk [vmem:[#allocation2 + $0x88] sm:$0x3] %vm267, 0.0
        %285 = vst.msk [vmem:[#allocation2 + $0x90] sm:$0xff] %vm265, 0.0
        %286 = vst.msk [vmem:[#allocation2 + $0x98] sm:$0x3] %vm267, 0.0
        %v287 = vmax.f32 %v249, %v250
        %s288 = scalar_lea.vmem [#allocation2], 16
        %289 = vst.msk [vmem:[%s288 + $0x1] sm:$0xff] %vm265, %v287
        %v290 = vmax.f32 %v251, %v252
        %s291 = scalar_lea.vmem [#allocation2], 32
        %292 = vst.msk [vmem:[%s291 + $0x1] sm:$0xff] %vm265, %v290
        %v293 = vmax.f32 %v253, %v254
        %s294 = scalar_lea.vmem [#allocation2], 48
        %295 = vst.msk [vmem:[%s294 + $0x1] sm:$0xff] %vm265, %v293
        %v296 = vmax.f32 %v255, %v256
        %s297 = scalar_lea.vmem [#allocation2], 64
        %298 = vst.msk [vmem:[%s297 + $0x1] sm:$0xff] %vm265, %v296
        %v299 = vmax.f32 %v257, %v258
        %s300 = scalar_lea.vmem [#allocation2], 80
        %301 = vst.msk [vmem:[%s300 + $0x1] sm:$0xff] %vm265, %v299
        %v302 = vmax.f32 %v259, %v260
        %s303 = scalar_lea.vmem [#allocation2], 96
        %304 = vst.msk [vmem:[%s303 + $0x1] sm:$0xff] %vm265, %v302
        %v305 = vmax.f32 %v261, %v262
        %s306 = scalar_lea.vmem [#allocation2], 112
        %307 = vst.msk [vmem:[%s306 + $0x1] sm:$0xff] %vm265, %v305
        %v308 = vmax.f32 %v263, %v264
        %s309 = scalar_lea.vmem [#allocation2], 128
        %310 = vst.msk [vmem:[%s309 + $0x1] sm:$0xff] %vm265, %v308
        %v311 = vld [vmem:[#allocation2] sm:$0xff]
        %v312 = vld [vmem:[#allocation2 + $0x1] sm:$0xff]
        %v313 = vld [vmem:[#allocation2 + $0x2] sm:$0xff]
        %v314 = vld [vmem:[%s288] sm:$0xff]
        %v315 = vld [vmem:[%s288 + $0x1] sm:$0xff]
        %v316 = vld [vmem:[%s288 + $0x2] sm:$0xff]
        %v317 = vld [vmem:[%s291] sm:$0xff]
        %v318 = vld [vmem:[%s291 + $0x1] sm:$0xff]
        %v319 = vld [vmem:[%s291 + $0x2] sm:$0xff]
        %321 = vrot.lane.b32.xlu0 %v312, 4
        %v322 = vpop.permute.xlu0 %321
        %325 = vrot.lane.b32.xlu0 %v313, 8
        %v326 = vpop.permute.xlu0 %325
        %329 = vrot.lane.b32.xlu0 %v314, 12
        %v330 = vpop.permute.xlu0 %329
        %333 = vrot.lane.b32.xlu0 %v315, 16
        %v334 = vpop.permute.xlu0 %333
        %337 = vrot.lane.b32.xlu0 %v316, 20
        %v338 = vpop.permute.xlu0 %337
        %341 = vrot.lane.b32.xlu0 %v317, 24
        %v342 = vpop.permute.xlu0 %341
        %345 = vrot.lane.b32.xlu0 %v318, 28
        %v346 = vpop.permute.xlu0 %345
        %349 = vrot.lane.b32.xlu0 %v319, 32
        %v350 = vpop.permute.xlu0 %349
        %v352 = vsel %vm265, %v311, %v322
        %vm353 = vcmask 64512
        %v354 = vsel %vm353, %v352, %v326
        %vm355 = vcmask 97280
        %v356 = vsel %vm355, %v354, %v330
        %vm357 = vcmask 130048
        %v358 = vsel %vm357, %v356, %v334
        %vm359 = vcmask 162816
        %v360 = vsel %vm359, %v358, %v338
        %vm361 = vcmask 195584
        %v362 = vsel %vm361, %v360, %v342
        %vm363 = vcmask 228352
        %v364 = vsel %vm363, %v362, %v346
        %vm365 = vcmask 261120
        %v366 = vsel %vm365, %v364, %v350
        %v367 = vld [vmem:[%s294] sm:$0xff]
        %v368 = vld [vmem:[%s294 + $0x1] sm:$0xff]
        %v369 = vld [vmem:[%s294 + $0x2] sm:$0xff]
        %370 = vrot.lane.b32.xlu0 %v315, 4
        %v371 = vpop.permute.xlu0 %370
        %373 = vrot.lane.b32.xlu0 %v316, 8
        %v374 = vpop.permute.xlu0 %373
        %376 = vrot.lane.b32.xlu0 %v317, 12
        %v377 = vpop.permute.xlu0 %376
        %379 = vrot.lane.b32.xlu0 %v318, 16
        %v380 = vpop.permute.xlu0 %379
        %382 = vrot.lane.b32.xlu0 %v319, 20
        %v383 = vpop.permute.xlu0 %382
        %386 = vrot.lane.b32.xlu0 %v367, 24
        %v387 = vpop.permute.xlu0 %386
        %390 = vrot.lane.b32.xlu0 %v368, 28
        %v391 = vpop.permute.xlu0 %390
        %394 = vrot.lane.b32.xlu0 %v369, 32
        %v395 = vpop.permute.xlu0 %394
        %v397 = vsel %vm265, %v314, %v371
        %v398 = vsel %vm353, %v397, %v374
        %v399 = vsel %vm355, %v398, %v377
        %v400 = vsel %vm357, %v399, %v380
        %v401 = vsel %vm359, %v400, %v383
        %v402 = vsel %vm361, %v401, %v387
        %v403 = vsel %vm363, %v402, %v391
        %v404 = vsel %vm365, %v403, %v395
        %v405 = vld [vmem:[%s297] sm:$0xff]
        %v406 = vld [vmem:[%s297 + $0x1] sm:$0xff]
        %v407 = vld [vmem:[%s297 + $0x2] sm:$0xff]
        %408 = vrot.lane.b32.xlu0 %v318, 4
        %v409 = vpop.permute.xlu0 %408
        %411 = vrot.lane.b32.xlu0 %v319, 8
        %v412 = vpop.permute.xlu0 %411
        %414 = vrot.lane.b32.xlu0 %v367, 12
        %v415 = vpop.permute.xlu0 %414
        %417 = vrot.lane.b32.xlu0 %v368, 16
        %v418 = vpop.permute.xlu0 %417
        %420 = vrot.lane.b32.xlu0 %v369, 20
        %v421 = vpop.permute.xlu0 %420
        %424 = vrot.lane.b32.xlu0 %v405, 24
        %v425 = vpop.permute.xlu0 %424
        %428 = vrot.lane.b32.xlu0 %v406, 28
        %v429 = vpop.permute.xlu0 %428
        %432 = vrot.lane.b32.xlu0 %v407, 32
        %v433 = vpop.permute.xlu0 %432
        %v435 = vsel %vm265, %v317, %v409
        %v436 = vsel %vm353, %v435, %v412
        %v437 = vsel %vm355, %v436, %v415
        %v438 = vsel %vm357, %v437, %v418
        %v439 = vsel %vm359, %v438, %v421
        %v440 = vsel %vm361, %v439, %v425
        %v441 = vsel %vm363, %v440, %v429
        %v442 = vsel %vm365, %v441, %v433
        %v443 = vld [vmem:[%s300] sm:$0xff]
        %v444 = vld [vmem:[%s300 + $0x1] sm:$0xff]
        %v445 = vld [vmem:[%s300 + $0x2] sm:$0xff]
        %446 = vrot.lane.b32.xlu0 %v368, 4
        %v447 = vpop.permute.xlu0 %446
        %449 = vrot.lane.b32.xlu0 %v369, 8
        %v450 = vpop.permute.xlu0 %449
        %452 = vrot.lane.b32.xlu0 %v405, 12
        %v453 = vpop.permute.xlu0 %452
        %455 = vrot.lane.b32.xlu0 %v406, 16
        %v456 = vpop.permute.xlu0 %455
        %458 = vrot.lane.b32.xlu0 %v407, 20
        %v459 = vpop.permute.xlu0 %458
        %462 = vrot.lane.b32.xlu0 %v443, 24
        %v463 = vpop.permute.xlu0 %462
        %466 = vrot.lane.b32.xlu0 %v444, 28
        %v467 = vpop.permute.xlu0 %466
        %470 = vrot.lane.b32.xlu0 %v445, 32
        %v471 = vpop.permute.xlu0 %470
        %v473 = vsel %vm265, %v367, %v447
        %v474 = vsel %vm353, %v473, %v450
        %v475 = vsel %vm355, %v474, %v453
        %v476 = vsel %vm357, %v475, %v456
        %v477 = vsel %vm359, %v476, %v459
        %v478 = vsel %vm361, %v477, %v463
        %v479 = vsel %vm363, %v478, %v467
        %v480 = vsel %vm365, %v479, %v471
        %v481 = vld [vmem:[%s303] sm:$0xff]
        %v482 = vld [vmem:[%s303 + $0x1] sm:$0xff]
        %v483 = vld [vmem:[%s303 + $0x2] sm:$0xff]
        %484 = vrot.lane.b32.xlu0 %v406, 4
        %v485 = vpop.permute.xlu0 %484
        %487 = vrot.lane.b32.xlu0 %v407, 8
        %v488 = vpop.permute.xlu0 %487
        %490 = vrot.lane.b32.xlu0 %v443, 12
        %v491 = vpop.permute.xlu0 %490
        %493 = vrot.lane.b32.xlu0 %v444, 16
        %v494 = vpop.permute.xlu0 %493
        %496 = vrot.lane.b32.xlu0 %v445, 20
        %v497 = vpop.permute.xlu0 %496
        %500 = vrot.lane.b32.xlu0 %v481, 24
        %v501 = vpop.permute.xlu0 %500
        %504 = vrot.lane.b32.xlu0 %v482, 28
        %v505 = vpop.permute.xlu0 %504
        %508 = vrot.lane.b32.xlu0 %v483, 32
        %v509 = vpop.permute.xlu0 %508
        %v511 = vsel %vm265, %v405, %v485
        %v512 = vsel %vm353, %v511, %v488
        %v513 = vsel %vm355, %v512, %v491
        %v514 = vsel %vm357, %v513, %v494
        %v515 = vsel %vm359, %v514, %v497
        %v516 = vsel %vm361, %v515, %v501
        %v517 = vsel %vm363, %v516, %v505
        %v518 = vsel %vm365, %v517, %v509
        %v519 = vld [vmem:[%s306] sm:$0xff]
        %v520 = vld [vmem:[%s306 + $0x1] sm:$0xff]
        %v521 = vld [vmem:[%s306 + $0x2] sm:$0xff]
        %522 = vrot.lane.b32.xlu0 %v444, 4
        %v523 = vpop.permute.xlu0 %522
        %525 = vrot.lane.b32.xlu0 %v445, 8
        %v526 = vpop.permute.xlu0 %525
        %528 = vrot.lane.b32.xlu0 %v481, 12
        %v529 = vpop.permute.xlu0 %528
        %531 = vrot.lane.b32.xlu0 %v482, 16
        %v532 = vpop.permute.xlu0 %531
        %534 = vrot.lane.b32.xlu0 %v483, 20
        %v535 = vpop.permute.xlu0 %534
        %538 = vrot.lane.b32.xlu0 %v519, 24
        %v539 = vpop.permute.xlu0 %538
        %542 = vrot.lane.b32.xlu0 %v520, 28
        %v543 = vpop.permute.xlu0 %542
        %546 = vrot.lane.b32.xlu0 %v521, 32
        %v547 = vpop.permute.xlu0 %546
        %v549 = vsel %vm265, %v443, %v523
        %v550 = vsel %vm353, %v549, %v526
        %v551 = vsel %vm355, %v550, %v529
        %v552 = vsel %vm357, %v551, %v532
        %v553 = vsel %vm359, %v552, %v535
        %v554 = vsel %vm361, %v553, %v539
        %v555 = vsel %vm363, %v554, %v543
        %v556 = vsel %vm365, %v555, %v547
        %v557 = vld [vmem:[%s309] sm:$0xff]
        %v558 = vld [vmem:[%s309 + $0x1] sm:$0xff]
        %v559 = vld [vmem:[%s309 + $0x2] sm:$0xff]
        %560 = vrot.lane.b32.xlu0 %v482, 4
        %v561 = vpop.permute.xlu0 %560
        %563 = vrot.lane.b32.xlu0 %v483, 8
        %v564 = vpop.permute.xlu0 %563
        %566 = vrot.lane.b32.xlu0 %v519, 12
        %v567 = vpop.permute.xlu0 %566
        %569 = vrot.lane.b32.xlu0 %v520, 16
        %v570 = vpop.permute.xlu0 %569
        %572 = vrot.lane.b32.xlu0 %v521, 20
        %v573 = vpop.permute.xlu0 %572
        %576 = vrot.lane.b32.xlu0 %v557, 24
        %v577 = vpop.permute.xlu0 %576
        %580 = vrot.lane.b32.xlu0 %v558, 28
        %v581 = vpop.permute.xlu0 %580
        %584 = vrot.lane.b32.xlu0 %v559, 32
        %v585 = vpop.permute.xlu0 %584
        %v587 = vsel %vm265, %v481, %v561
        %v588 = vsel %vm353, %v587, %v564
        %v589 = vsel %vm355, %v588, %v567
        %v590 = vsel %vm357, %v589, %v570
        %v591 = vsel %vm359, %v590, %v573
        %v592 = vsel %vm361, %v591, %v577
        %v593 = vsel %vm363, %v592, %v581
        %v594 = vsel %vm365, %v593, %v585
        %s595 = scalar_lea.vmem [#allocation2], 144
        %v596 = vld [vmem:[%s595] sm:$0xff]
        %v597 = vld [vmem:[%s595 + $0x1] sm:$0xff]
        %v598 = vld [vmem:[%s595 + $0x2] sm:$0xff]
        %599 = vrot.lane.b32.xlu0 %v520, 4
        %v600 = vpop.permute.xlu0 %599
        %602 = vrot.lane.b32.xlu0 %v521, 8
        %v603 = vpop.permute.xlu0 %602
        %605 = vrot.lane.b32.xlu0 %v557, 12
        %v606 = vpop.permute.xlu0 %605
        %608 = vrot.lane.b32.xlu0 %v558, 16
        %v609 = vpop.permute.xlu0 %608
        %611 = vrot.lane.b32.xlu0 %v559, 20
        %v612 = vpop.permute.xlu0 %611
        %615 = vrot.lane.b32.xlu0 %v596, 24
        %v616 = vpop.permute.xlu0 %615
        %619 = vrot.lane.b32.xlu0 %v597, 28
        %v620 = vpop.permute.xlu0 %619
        %623 = vrot.lane.b32.xlu0 %v598, 32
        %v624 = vpop.permute.xlu0 %623
        %v626 = vsel %vm265, %v519, %v600
        %v627 = vsel %vm353, %v626, %v603
        %v628 = vsel %vm355, %v627, %v606
        %v629 = vsel %vm357, %v628, %v609
        %v630 = vsel %vm359, %v629, %v612
        %v631 = vsel %vm361, %v630, %v616
        %v632 = vsel %vm363, %v631, %v620
        %v633 = vsel %vm365, %v632, %v624
        %v634 = vld [vmem:[%s1] sm:$0xff]
        %v635 = vld [vmem:[%s1 + $0x8] sm:$0xff]
        %v636 = vld [vmem:[%s1 + $0x10] sm:$0xff]
        %v637 = vld [vmem:[%s1 + $0x18] sm:$0xff]
        %v638 = vld [vmem:[%s1 + $0x20] sm:$0xf]
        %vm639 = vcmask 293888
        %v641 = vsel %vm639, %v366, 0
        %v644 = vsel %vm639, %v404, 0
        %v647 = vsel %vm639, %v442, 0
        %v650 = vsel %vm639, %v480, 0
        %v653 = vsel %vm639, %v518, 0
        %v656 = vsel %vm639, %v556, 0
        %v659 = vsel %vm639, %v594, 0
        %v662 = vsel %vm639, %v633, 0
        %vm664 = vcmask 1043456
        %v666 = vsel %vm664, %v638, 0
        %668 = vmatprep.subr.mxu0 0.0
        %669 = vmatpush1.msra.mxu0 0.0
        %670 = vmatprep.subr.mxu0 0.0
        %671 = vmatpush1.msra.mxu0 0.0
        %672 = vmatprep.subr.mxu0 0.0
        %673 = vmatpush1.msra.mxu0 0.0
        %674 = vmatprep.subr.mxu0 0.0
        %675 = vmatpush1.msra.mxu0 0.0
        %676 = vmatprep.subr.mxu0 0.0
        %677 = vmatpush1.msra.mxu0 0.0
        %678 = vmatprep.subr.mxu0 0.0
        %679 = vmatpush1.msra.mxu0 0.0
        %680 = vmatprep.subr.mxu0 0.0
        %681 = vmatpush1.msra.mxu0 0.0
        %682 = vmatprep.subr.mxu0 0.0
        %683 = vmatpush1.msra.mxu0 0.0
        %684 = vmatprep.subr.mxu0 0.0
        %685 = vmatpush1.msra.mxu0 0.0
        %686 = vmatprep.subr.mxu0 0.0
        %687 = vmatpush1.msra.mxu0 0.0
        %688 = vmatprep.subr.mxu0 0.0
        %689 = vmatpush1.msra.mxu0 0.0
        %690 = vmatprep.subr.mxu0 0.0
        %691 = vmatpush1.msra.mxu0 %v666
        %692 = vmatprep.subr.mxu0 0.0
        %693 = vmatpush1.msra.mxu0 %v637
        %694 = vmatprep.subr.mxu0 0.0
        %695 = vmatpush1.msra.mxu0 %v636
        %696 = vmatprep.subr.mxu0 0.0
        %697 = vmatpush1.msra.mxu0 %v635
        %698 = vmatprep.subr.mxu0 0.0
        %699 = vmatpush1.msra.mxu0 %v634
        %700 = vmatprep.subr.mxu0 0.0
        %701 = vmatpush2.msra.mxu0 0.0
        %702 = vmatprep.subr.mxu0 0.0
        %703 = vmatpush2.msra.mxu0 0.0
        %704 = vmatprep.subr.mxu0 0.0
        %705 = vmatpush2.msra.mxu0 0.0
        %706 = vmatprep.subr.mxu0 0.0
        %707 = vmatpush2.msra.mxu0 0.0
        %708 = vmatprep.subr.mxu0 0.0
        %709 = vmatpush2.msra.mxu0 0.0
        %710 = vmatprep.subr.mxu0 0.0
        %711 = vmatpush2.msra.mxu0 0.0
        %712 = vmatprep.subr.mxu0 0.0
        %713 = vmatpush2.msra.mxu0 0.0
        %714 = vmatprep.subr.mxu0 0.0
        %715 = vmatpush2.msra.mxu0 0.0
        %716 = vmatprep.subr.mxu0 0.0
        %717 = vmatpush2.msra.mxu0 0.0
        %718 = vmatprep.subr.mxu0 0.0
        %719 = vmatpush2.msra.mxu0 0.0
        %720 = vmatprep.subr.mxu0 0.0
        %721 = vmatpush2.msra.mxu0 0.0
        %722 = vmatprep.subr.mxu0 0.0
        %723 = vmatpush2.msra.mxu0 0.0
        %724 = vmatprep.subr.mxu0 0.0
        %725 = vmatpush2.msra.mxu0 0.0
        %726 = vmatprep.subr.mxu0 0.0
        %727 = vmatpush2.msra.mxu0 0.0
        %728 = vmatprep.subr.mxu0 0.0
        %729 = vmatpush2.msra.mxu0 0.0
        %730 = vmatprep.subr.mxu0 0.0
        %731 = vmatpush2.msra.mxu0 0.0
        %732 = vmatprep.mubr.f32.mxu0 0.0
        %733 = vmatmul.mubr.f32.gmra.mxu0 %v641
        %v734 = vpop.f32.mrf.mxu0
        %v735 = vadd.f32 0.0, %v734
        %v736 = vpop.f32.mrf.mxu0
        %737 = vmatprep.mubr.f32.mxu0 0.0
        %738 = vmatmul.mubr.f32.gmra.mxu0 %v644
        %v739 = vpop.f32.mrf.mxu0
        %v740 = vadd.f32 0.0, %v739
        %v741 = vpop.f32.mrf.mxu0
        %742 = vmatprep.mubr.f32.mxu0 0.0
        %743 = vmatmul.mubr.f32.gmra.mxu0 %v647
        %v744 = vpop.f32.mrf.mxu0
        %v745 = vadd.f32 0.0, %v744
        %v746 = vpop.f32.mrf.mxu0
        %747 = vmatprep.mubr.f32.mxu0 0.0
        %748 = vmatmul.mubr.f32.gmra.mxu0 %v650
        %v749 = vpop.f32.mrf.mxu0
        %v750 = vadd.f32 0.0, %v749
        %v751 = vpop.f32.mrf.mxu0
        %752 = vmatprep.mubr.f32.mxu0 0.0
        %753 = vmatmul.mubr.f32.gmra.mxu0 %v653
        %v754 = vpop.f32.mrf.mxu0
        %v755 = vadd.f32 0.0, %v754
        %v756 = vpop.f32.mrf.mxu0
        %757 = vmatprep.mubr.f32.mxu0 0.0
        %758 = vmatmul.mubr.f32.gmra.mxu0 %v656
        %v759 = vpop.f32.mrf.mxu0
        %v760 = vadd.f32 0.0, %v759
        %v761 = vpop.f32.mrf.mxu0
        %762 = vmatprep.mubr.f32.mxu0 0.0
        %763 = vmatmul.mubr.f32.gmra.mxu0 %v659
        %v764 = vpop.f32.mrf.mxu0
        %v765 = vadd.f32 0.0, %v764
        %v766 = vpop.f32.mrf.mxu0
        %767 = vmatprep.mubr.f32.mxu0 0.0
        %768 = vmatmul.mubr.f32.gmra.mxu0 %v662
        %v769 = vpop.f32.mrf.mxu0
        %v770 = vadd.f32 0.0, %v769
        %v771 = vpop.f32.mrf.mxu0
        %772 = vdwg.mxu0
        %773 = vst [vmem:[%s160] sm:$0xff] %v735
        %774 = vst [vmem:[%s160 + $0x8] sm:$0xff] %v740
        %775 = vst [vmem:[%s160 + $0x10] sm:$0xff] %v745
        %776 = vst [vmem:[%s160 + $0x18] sm:$0xff] %v750
        %777 = vst [vmem:[%s160 + $0x20] sm:$0xff] %v755
        %778 = vst [vmem:[%s160 + $0x28] sm:$0xff] %v760
        %779 = vst [vmem:[%s160 + $0x30] sm:$0xff] %v765
        %780 = vst [vmem:[%s160 + $0x38] sm:$0xff] %v770
        %p781 = scmp.eq.s32.totalorder %s19, 0
        // Predicated region
        $region29: #{tpu_custom_call.1} parent=27 // pred_check
          %p782 = pneg %p781
        $region30: #{tpu_custom_call.1} parent=27 // pred_check_branch
          %784 = sbr.rel (%p782) target = $region32
        $region31: #{tpu_custom_call.1} parent=27 // pred_region
          %785 = vst [vmem:[#allocation5] sm:$0x3] 0.0
        $region32: #{tpu_custom_call.1} parent=27 // pred_fallthru
          _
        %v786 = vld [vmem:[#allocation5] sm:$0x3]
        %v787 = vadd.f32 %v735, %v740
        %v788 = vadd.f32 %v787, %v745
        %v789 = vadd.f32 %v788, %v750
        %v790 = vadd.f32 %v789, %v755
        %v791 = vadd.f32 %v790, %v760
        %v792 = vadd.f32 %v791, %v765
        %v793 = vadd.f32 %v792, %v770
        %v794 = vrot.slane %v793, 4
        %v795 = vadd.f32 %v793, %v794
        %v796 = vrot.slane %v795, 2
        %v797 = vadd.f32 %v795, %v796
        %v798 = vrot.slane %v797, 1
        %v799 = vadd.f32 %v797, %v798
        %v800 = vmul.f32 %v735, %v735
        %v801 = vmul.f32 %v740, %v740
        %v802 = vmul.f32 %v745, %v745
        %v803 = vmul.f32 %v750, %v750
        %v804 = vmul.f32 %v755, %v755
        %v805 = vmul.f32 %v760, %v760
        %v806 = vmul.f32 %v765, %v765
        %v807 = vmul.f32 %v770, %v770
        %v808 = vadd.f32 %v800, %v801
        %v809 = vadd.f32 %v808, %v802
        %v810 = vadd.f32 %v809, %v803
        %v811 = vadd.f32 %v810, %v804
        %v812 = vadd.f32 %v811, %v805
        %v813 = vadd.f32 %v812, %v806
        %v814 = vadd.f32 %v813, %v807
        %v815 = vrot.slane %v814, 4
        %v816 = vadd.f32 %v814, %v815
        %v817 = vrot.slane %v816, 2
        %v818 = vadd.f32 %v816, %v817
        %v819 = vrot.slane %v818, 1
        %v820 = vadd.f32 %v818, %v819
        %vm821 = vcmask 1040384
        %v822 = vsel %vm821, %v799, %v820
        %v823 = vadd.f32 %v786, %v822
        %824 = vst [vmem:[#allocation5] sm:$0x3] %v823
        %s825 = sand.u32 %s74, 1
        %s826 = scalar_lea.sflag [#allocation4], %s825
        %s827 = sand.u32 %s74, 1
        %s828 = smul.addr %s827, 64
        %s829 = scalar_lea.vmem [#allocation3], %s828
        // Predicated region
        $region33: #{tpu_custom_call.1} parent=27 // pred_check
          %p830 = pneg %p84
        $region34: #{tpu_custom_call.1} parent=27 // pred_check_branch
          %832 = sbr.rel (%p830) target = $region36
        $region35: #{tpu_custom_call.1} parent=27 // pred_region
          %s833 = smul.u32 8, %s19
          %s835 = ssub.s32 1024, 1024
          %836 = vsyncadd %s826, %s835
          %s837 = smul.addr %s833, 128
          %s838 = scalar_lea.hbm %s2, %s837
          %s839 = sshll.u32 %s829, 4
          %s840 = int_to_ptr.vmem [resolvable:$true] %s839
          %845 = dma.vmem_to_hbm [thread:$0]  %s840, 1024, %s838, %s826, 128, 128, 8
        $region36: #{tpu_custom_call.1} parent=27 // pred_fallthru
          _
        // Predicated region
        $region37: #{tpu_custom_call.1} parent=27 // pred_check
          %p846 = pneg %p105
        $region38: #{tpu_custom_call.1} parent=27 // pred_check_branch
          %848 = sbr.rel (%p846) target = $region40
        $region39: #{tpu_custom_call.1} parent=27 // pred_region
          %s850 = ssub.s32 32, 32
          %851 = vsyncadd [#allocation6], %s850
          %s853 = sshll.u32 [#allocation5], 4
          %s854 = int_to_ptr.vmem [resolvable:$true] %s853
          %856 = dma.vmem_to_hbm [thread:$0]  %s854, 32, %s3, [#allocation6]
        $region40: #{tpu_custom_call.1} parent=27 // pred_fallthru
          _
        // Predicated region
        $region41: #{tpu_custom_call.1} parent=27 // pred_check
          %p857 = pneg %p105
        $region42: #{tpu_custom_call.1} parent=27 // pred_check_branch
          %859 = sbr.rel (%p857) target = $region44
        $region43: #{tpu_custom_call.1} parent=27 // pred_region
          %860 = dma.done [#allocation6], 32
        $region44: #{tpu_custom_call.1} parent=27 // pred_fallthru
          _
      $region28: #{tpu_custom_call.1} parent=5 // pred_fallthru
        _
      %p861 = scmp.le.s32.totalorder 2, %s14
      // Predicated region
      $region45: #{tpu_custom_call.1} parent=5 // pred_check
        %p862 = pneg %p861
      $region46: #{tpu_custom_call.1} parent=5 // pred_check_branch
        %864 = sbr.rel (%p862) target = $region48
      $region47: #{tpu_custom_call.1} parent=5 // pred_region
        %s865 = ssub.s32 %s14, 2
        // Predicated region
        $region49: #{tpu_custom_call.1} parent=47 // pred_check
          %p866 = pneg %p90
        $region50: #{tpu_custom_call.1} parent=47 // pred_check_branch
          %868 = sbr.rel (%p866) target = $region52
        $region51: #{tpu_custom_call.1} parent=47 // pred_region
          %s869 = sand.u32 %s75, 1
          %s870 = scalar_lea.sflag [#allocation4], %s869
          %s871 = sand.u32 %s75, 1
          %s872 = smul.addr %s871, 64
          %s873 = scalar_lea.vmem [#allocation3], %s872
          %874 = dma.done %s870, 1024
        $region52: #{tpu_custom_call.1} parent=47 // pred_fallthru
          _
      $region48: #{tpu_custom_call.1} parent=5 // pred_fallthru
        _
    $region6: #{tpu_custom_call.1} parent=1 // loop_footer
      %s18 = sadd.s32 1, %s14
    $region7: #{tpu_custom_call.1} parent=1 // loop_footer_branch
      %13 = sbr.rel target = $region3
    $region8: #{tpu_custom_call.1} parent=1 // loop_exit
      _
    %875 = vsyncpa [#allocation4], 1
    %s876 = scalar_lea.sflag [#allocation4], 1
    %877 = vsyncpa %s876, 1
    %878 = vsyncpa [#allocation6], 1

</llo_original>
